<compile_context>
chip_gen: v7x
topology: tpu7x:2x2x1
jax: 0.10.0
libtpu: 0.0.40
codegen_flags: <defaults>
</compile_context>

<pallas_src>
import functools

import jax
import jax.numpy as jnp
from jax.experimental import pallas as pl
from jax.experimental.pallas import tpu as pltpu


def _attn_kernel(x_ref, wqkv_ref, wp_ref, bias_ref, y_ref, attn_ref, *, num_heads):
    # x_ref:    (1, N, C)     bf16
    # wqkv_ref: (C, 3C)       bf16, softmax scale pre-folded into the q columns
    # wp_ref:   (C, C)        bf16, pre-transposed output projection
    # bias_ref: (1, C)        f32
    # y_ref:    (1, N, C)
    # attn_ref: (1, N, H*N)   lane-dense per-batch slab; wrapper -> (B, H, N, N)
    cdt = x_ref.dtype                                   # bf16 MXU compute dtype
    x = x_ref[0]                                        # (N, C)
    N = x.shape[0]
    C = x.shape[1]
    hd = C // num_heads

    # Fused q/k/v projection: one wide MXU matmul per batch step.
    qkv = jnp.dot(x, wqkv_ref[...],
                  preferred_element_type=jnp.float32)   # (N, 3C) f32
    qkv_c = qkv.astype(cdt)                             # cast once for MXU reuse

    probs = []
    outs = []
    # Static (trace-time unrolled) head loop; H is small.
    for h in range(num_heads):
        q = qkv_c[:, h * hd:(h + 1) * hd]               # (N, hd)
        k = qkv_c[:, C + h * hd:C + (h + 1) * hd]       # (N, hd)
        v = qkv_c[:, 2 * C + h * hd:2 * C + (h + 1) * hd]

        # Scores: contract the head dim of both operands (no in-kernel transpose).
        s = jax.lax.dot_general(q, k, (((1,), (1,)), ((), ())),
                                preferred_element_type=jnp.float32)   # (N, N)

        # Softmax in f32 (scale already folded into wq); approx recip -> EUP slot.
        s = s - jnp.max(s, axis=-1, keepdims=True)
        e = jnp.exp(s)
        p = e * pl.reciprocal(jnp.sum(e, axis=-1, keepdims=True), approx=True)

        probs.append(p)
        outs.append(jnp.dot(p.astype(cdt), v,
                            preferred_element_type=jnp.float32))      # (N, hd)

    # Single lane-dense store of all heads' attention probabilities for this batch.
    attn_ref[0] = jnp.concatenate(probs, axis=-1).astype(attn_ref.dtype)  # (N, H*N)

    # Concatenate head outputs along lanes, then ONE C-deep output projection.
    o = jnp.concatenate(outs, axis=-1).astype(cdt)                        # (N, C)
    y_ref[0] = (jnp.dot(o, wp_ref[...], preferred_element_type=jnp.float32)
                + bias_ref[...]).astype(y_ref.dtype)


def attention_pallas(x, w_qkv, w_proj, b_proj, num_heads,
                     compute_dtype=jnp.bfloat16, attn_dtype=None):
    """x: (B, N, C). w_qkv: (3C, C), w_proj: (C, C), b_proj: (C,) in torch Linear
    layout (out_features, in_features). Returns (y, attn) = ((B,N,C), (B,H,N,N))."""
    B, N, C = x.shape
    H = num_heads
    hd = C // H
    scale = hd ** (-0.5)
    out_dtype = x.dtype
    attn_dtype = out_dtype if attn_dtype is None else attn_dtype

    # torch.nn.Linear stores (out, in): y = x @ W.T -> pre-transpose once here.
    w_qkv_t = jnp.asarray(w_qkv, jnp.float32).T                 # (C, 3C)
    # Fold the softmax scale into the q columns (in f32, before the bf16 cast).
    w_qkv_t = jnp.concatenate([w_qkv_t[:, :C] * scale, w_qkv_t[:, C:]], axis=1)
    w_qkv_c = w_qkv_t.astype(compute_dtype)                     # (C, 3C)
    w_proj_c = jnp.asarray(w_proj, jnp.float32).T.astype(compute_dtype)  # (C, C)
    bias = jnp.asarray(b_proj, jnp.float32).reshape(1, C)
    x_c = x.astype(compute_dtype)

    grid_spec = pltpu.PrefetchScalarGridSpec(
        num_scalar_prefetch=0,
        grid=(B,),                                              # one step per batch
        in_specs=[
            pl.BlockSpec((1, N, C), lambda b: (b, 0, 0)),       # x
            pl.BlockSpec((C, 3 * C), lambda b: (0, 0)),         # fused qkv weight
            pl.BlockSpec((C, C), lambda b: (0, 0)),             # output projection
            pl.BlockSpec((1, C), lambda b: (0, 0)),             # proj bias
        ],
        out_specs=[
            pl.BlockSpec((1, N, C), lambda b: (b, 0, 0)),       # y
            pl.BlockSpec((1, N, H * N), lambda b: (b, 0, 0)),   # attn slab
        ],
        scratch_shapes=[],
    )

    itm = jnp.dtype(compute_dtype).itemsize
    otm = jnp.dtype(out_dtype).itemsize
    atm = jnp.dtype(attn_dtype).itemsize
    flops = 2 * B * (3 * N * C * C + 2 * H * N * N * hd + N * C * C)
    bytes_accessed = (B * N * C * itm              # x
                      + 4 * C * C * itm            # qkv + proj weights (DMA'd once)
                      + C * 4                      # bias
                      + B * N * C * otm            # y
                      + B * H * N * N * atm)       # attn
    cost = pl.CostEstimate(flops=flops,
                           transcendentals=B * H * N * N,
                           bytes_accessed=bytes_accessed)

    y, attn_slab = pl.pallas_call(
        functools.partial(_attn_kernel, num_heads=H),
        out_shape=(jax.ShapeDtypeStruct((B, N, C), out_dtype),
                   jax.ShapeDtypeStruct((B, N, H * N), attn_dtype)),
        grid_spec=grid_spec,
        compiler_params=pltpu.CompilerParams(
            dimension_semantics=("parallel",),
            vmem_limit_bytes=32 * 1024 * 1024),
        cost_estimate=cost,
    )(x_c, w_qkv_c, w_proj_c, bias)

    # (B, N, H*N) -> (B, N, H, N) -> (B, H, N, N); layout plumbing in XLA.
    attn = attn_slab.reshape(B, N, H, N).transpose(0, 2, 1, 3)
    return y, attn


def attention_reference(x, w_qkv, w_proj, b_proj, num_heads):
    """Pure-JAX (f32) reference mirroring the PyTorch forward."""
    B, N, C = x.shape
    H = num_heads
    hd = C // H
    scale = hd ** (-0.5)
    qkv = jnp.einsum('bnc,oc->bno', x, w_qkv)                       # (B, N, 3C)
    qkv = qkv.reshape(B, N, 3, H, hd).transpose(2, 0, 3, 1, 4)      # (3, B, H, N, hd)
    q, k, v = qkv[0], qkv[1], qkv[2]
    attn = jnp.einsum('bhqd,bhkd->bhqk', q, k) * scale
    attn = jax.nn.softmax(attn, axis=-1)
    y = jnp.einsum('bhqk,bhkd->bhqd', attn, v)                      # (B, H, N, hd)
    y = y.transpose(0, 2, 1, 3).reshape(B, N, C)
    y = jnp.einsum('bnc,oc->bno', y, w_proj) + b_proj
    return y, attn


if __name__ == "__main__":
    # Small shapes consistent with the module: dim=32, num_heads=8 -> head_dim=4.
    B, N, C = 2, 8, 32
    num_heads = 8

    key = jax.random.PRNGKey(0)
    kx, kqkv, kproj, kbias = jax.random.split(key, 4)

    x = jax.random.normal(kx, (B, N, C), dtype=jnp.float32)
    # torch.nn.Linear layout: (out_features, in_features); qkv_bias=False.
    w_qkv = 0.05 * jax.random.normal(kqkv, (3 * C, C), dtype=jnp.float32)
    w_proj = 0.05 * jax.random.normal(kproj, (C, C), dtype=jnp.float32)
    b_proj = 0.01 * jax.random.normal(kbias, (C,), dtype=jnp.float32)

    y, attn = attention_pallas(x, w_qkv, w_proj, b_proj, num_heads)
    y = jax.block_until_ready(y)
    attn = jax.block_until_ready(attn)

    y_exp, attn_exp = attention_reference(x, w_qkv, w_proj, b_proj, num_heads)
    assert y.shape == (B, N, C) and attn.shape == (B, num_heads, N, N)
    # bf16 MXU operands + approx-reciprocal softmax vs. an f32 reference.
    assert jnp.allclose(y, y_exp, atol=2e-2, rtol=2e-2), float(jnp.max(jnp.abs(y - y_exp)))
    assert jnp.allclose(attn, attn_exp, atol=2e-2, rtol=2e-2), float(jnp.max(jnp.abs(attn - attn_exp)))

    print("KERNEL_OK")
</pallas_src>

<mosaic_0001>
module attributes {stable_mosaic.version = 11 : i64} {
  func.func @_attn_kernel(%arg0: i32, %arg1: memref<1x8x32xbf16, #tpu.memory_space<vmem>>, %arg2: memref<32x96xbf16, #tpu.memory_space<vmem>>, %arg3: memref<32x32xbf16, #tpu.memory_space<vmem>>, %arg4: memref<1x32xf32, #tpu.memory_space<vmem>>, %arg5: memref<1x8x32xf32, #tpu.memory_space<vmem>>, %arg6: memref<1x8x64xf32, #tpu.memory_space<vmem>>) attributes {dimension_semantics = [#tpu.dimension_semantics<parallel>], iteration_bounds = array<i64: 2>, scalar_prefetch = 0 : i64, scratch_operands = 0 : i64, tpu.core_type = #tpu.core_type<tc>, window_params = [{transform_indices = @transform_0, window_bounds = array<i64: 1, 8, 32>}, {pipeline_mode = #tpu.pipeline_mode<synchronous>, transform_indices = @transform_1, window_bounds = array<i64: 32, 96>}, {pipeline_mode = #tpu.pipeline_mode<synchronous>, transform_indices = @transform_2, window_bounds = array<i64: 32, 32>}, {pipeline_mode = #tpu.pipeline_mode<synchronous>, transform_indices = @transform_3, window_bounds = array<i64: 1, 32>}, {transform_indices = @transform_4, window_bounds = array<i64: 1, 8, 32>}, {transform_indices = @transform_5, window_bounds = array<i64: 1, 8, 64>}]} {
    %c0 = arith.constant 0 : index
    %c0_0 = arith.constant 0 : index
    %c0_1 = arith.constant 0 : index
    %0 = vector.load %arg1[%c0, %c0_0, %c0_1] : memref<1x8x32xbf16, #tpu.memory_space<vmem>>, vector<1x8x32xbf16>
    %1 = vector.shape_cast %0 : vector<1x8x32xbf16> to vector<8x32xbf16>
    %c0_2 = arith.constant 0 : index
    %c0_3 = arith.constant 0 : index
    %2 = vector.load %arg2[%c0_2, %c0_3] : memref<32x96xbf16, #tpu.memory_space<vmem>>, vector<32x96xbf16>
    %cst = arith.constant dense<0.000000e+00> : vector<8x96xf32>
    %3 = tpu.matmul %1, %2, %cst {dimension_numbers = #tpu.dot_dimension_numbers<[1], [0], [0], [1], [0, 0, 1, 1], [], []>} : vector<8x32xbf16>, vector<32x96xbf16>, vector<8x96xf32> -> vector<8x96xf32>
    %4 = arith.truncf %3 : vector<8x96xf32> to vector<8x96xbf16>
    %5 = vector.extract_strided_slice %4 {offsets = [0, 0], sizes = [8, 4], strides = [1, 1]} : vector<8x96xbf16> to vector<8x4xbf16>
    %6 = vector.extract_strided_slice %4 {offsets = [0, 32], sizes = [8, 4], strides = [1, 1]} : vector<8x96xbf16> to vector<8x4xbf16>
    %7 = vector.extract_strided_slice %4 {offsets = [0, 64], sizes = [8, 4], strides = [1, 1]} : vector<8x96xbf16> to vector<8x4xbf16>
    %cst_4 = arith.constant dense<0.000000e+00> : vector<8x8xf32>
    %8 = tpu.matmul %5, %6, %cst_4 {dimension_numbers = #tpu.dot_dimension_numbers<[1], [1], [0], [0], [0, 0, 1, 0], [], []>} : vector<8x4xbf16>, vector<8x4xbf16>, vector<8x8xf32> -> vector<8x8xf32>
    %cst_5 = arith.constant dense<0xFF800000> : vector<8xf32>
    %9 = vector.multi_reduction <maximumf>, %8, %cst_5 [1] : vector<8x8xf32> to vector<8xf32>
    %10 = vector.shape_cast %9 : vector<8xf32> to vector<8x1xf32>
    %11 = vector.broadcast %10 : vector<8x1xf32> to vector<8x8xf32>
    %12 = arith.subf %8, %11 : vector<8x8xf32>
    %13 = math.exp %12 : vector<8x8xf32>
    %cst_6 = arith.constant dense<0.000000e+00> : vector<8xf32>
    %14 = vector.multi_reduction <add>, %13, %cst_6 [1] : vector<8x8xf32> to vector<8xf32>
    %15 = vector.shape_cast %14 : vector<8xf32> to vector<8x1xf32>
    %16 = tpu.reciprocal %15 {approx = true} : vector<8x1xf32> -> vector<8x1xf32>
    %17 = vector.broadcast %16 : vector<8x1xf32> to vector<8x8xf32>
    %18 = arith.mulf %13, %17 : vector<8x8xf32>
    %19 = arith.truncf %18 : vector<8x8xf32> to vector<8x8xbf16>
    %cst_7 = arith.constant dense<0.000000e+00> : vector<8x4xf32>
    %20 = tpu.matmul %19, %7, %cst_7 {dimension_numbers = #tpu.dot_dimension_numbers<[1], [0], [0], [1], [0, 0, 1, 1], [], []>} : vector<8x8xbf16>, vector<8x4xbf16>, vector<8x4xf32> -> vector<8x4xf32>
    %21 = vector.extract_strided_slice %4 {offsets = [0, 4], sizes = [8, 4], strides = [1, 1]} : vector<8x96xbf16> to vector<8x4xbf16>
    %22 = vector.extract_strided_slice %4 {offsets = [0, 36], sizes = [8, 4], strides = [1, 1]} : vector<8x96xbf16> to vector<8x4xbf16>
    %23 = vector.extract_strided_slice %4 {offsets = [0, 68], sizes = [8, 4], strides = [1, 1]} : vector<8x96xbf16> to vector<8x4xbf16>
    %cst_8 = arith.constant dense<0.000000e+00> : vector<8x8xf32>
    %24 = tpu.matmul %21, %22, %cst_8 {dimension_numbers = #tpu.dot_dimension_numbers<[1], [1], [0], [0], [0, 0, 1, 0], [], []>} : vector<8x4xbf16>, vector<8x4xbf16>, vector<8x8xf32> -> vector<8x8xf32>
    %cst_9 = arith.constant dense<0xFF800000> : vector<8xf32>
    %25 = vector.multi_reduction <maximumf>, %24, %cst_9 [1] : vector<8x8xf32> to vector<8xf32>
    %26 = vector.shape_cast %25 : vector<8xf32> to vector<8x1xf32>
    %27 = vector.broadcast %26 : vector<8x1xf32> to vector<8x8xf32>
    %28 = arith.subf %24, %27 : vector<8x8xf32>
    %29 = math.exp %28 : vector<8x8xf32>
    %cst_10 = arith.constant dense<0.000000e+00> : vector<8xf32>
    %30 = vector.multi_reduction <add>, %29, %cst_10 [1] : vector<8x8xf32> to vector<8xf32>
    %31 = vector.shape_cast %30 : vector<8xf32> to vector<8x1xf32>
    %32 = tpu.reciprocal %31 {approx = true} : vector<8x1xf32> -> vector<8x1xf32>
    %33 = vector.broadcast %32 : vector<8x1xf32> to vector<8x8xf32>
    %34 = arith.mulf %29, %33 : vector<8x8xf32>
    %35 = arith.truncf %34 : vector<8x8xf32> to vector<8x8xbf16>
    %cst_11 = arith.constant dense<0.000000e+00> : vector<8x4xf32>
    %36 = tpu.matmul %35, %23, %cst_11 {dimension_numbers = #tpu.dot_dimension_numbers<[1], [0], [0], [1], [0, 0, 1, 1], [], []>} : vector<8x8xbf16>, vector<8x4xbf16>, vector<8x4xf32> -> vector<8x4xf32>
    %37 = vector.extract_strided_slice %4 {offsets = [0, 8], sizes = [8, 4], strides = [1, 1]} : vector<8x96xbf16> to vector<8x4xbf16>
    %38 = vector.extract_strided_slice %4 {offsets = [0, 40], sizes = [8, 4], strides = [1, 1]} : vector<8x96xbf16> to vector<8x4xbf16>
    %39 = vector.extract_strided_slice %4 {offsets = [0, 72], sizes = [8, 4], strides = [1, 1]} : vector<8x96xbf16> to vector<8x4xbf16>
    %cst_12 = arith.constant dense<0.000000e+00> : vector<8x8xf32>
    %40 = tpu.matmul %37, %38, %cst_12 {dimension_numbers = #tpu.dot_dimension_numbers<[1], [1], [0], [0], [0, 0, 1, 0], [], []>} : vector<8x4xbf16>, vector<8x4xbf16>, vector<8x8xf32> -> vector<8x8xf32>
    %cst_13 = arith.constant dense<0xFF800000> : vector<8xf32>
    %41 = vector.multi_reduction <maximumf>, %40, %cst_13 [1] : vector<8x8xf32> to vector<8xf32>
    %42 = vector.shape_cast %41 : vector<8xf32> to vector<8x1xf32>
    %43 = vector.broadcast %42 : vector<8x1xf32> to vector<8x8xf32>
    %44 = arith.subf %40, %43 : vector<8x8xf32>
    %45 = math.exp %44 : vector<8x8xf32>
    %cst_14 = arith.constant dense<0.000000e+00> : vector<8xf32>
    %46 = vector.multi_reduction <add>, %45, %cst_14 [1] : vector<8x8xf32> to vector<8xf32>
    %47 = vector.shape_cast %46 : vector<8xf32> to vector<8x1xf32>
    %48 = tpu.reciprocal %47 {approx = true} : vector<8x1xf32> -> vector<8x1xf32>
    %49 = vector.broadcast %48 : vector<8x1xf32> to vector<8x8xf32>
    %50 = arith.mulf %45, %49 : vector<8x8xf32>
    %51 = arith.truncf %50 : vector<8x8xf32> to vector<8x8xbf16>
    %cst_15 = arith.constant dense<0.000000e+00> : vector<8x4xf32>
    %52 = tpu.matmul %51, %39, %cst_15 {dimension_numbers = #tpu.dot_dimension_numbers<[1], [0], [0], [1], [0, 0, 1, 1], [], []>} : vector<8x8xbf16>, vector<8x4xbf16>, vector<8x4xf32> -> vector<8x4xf32>
    %53 = vector.extract_strided_slice %4 {offsets = [0, 12], sizes = [8, 4], strides = [1, 1]} : vector<8x96xbf16> to vector<8x4xbf16>
    %54 = vector.extract_strided_slice %4 {offsets = [0, 44], sizes = [8, 4], strides = [1, 1]} : vector<8x96xbf16> to vector<8x4xbf16>
    %55 = vector.extract_strided_slice %4 {offsets = [0, 76], sizes = [8, 4], strides = [1, 1]} : vector<8x96xbf16> to vector<8x4xbf16>
    %cst_16 = arith.constant dense<0.000000e+00> : vector<8x8xf32>
    %56 = tpu.matmul %53, %54, %cst_16 {dimension_numbers = #tpu.dot_dimension_numbers<[1], [1], [0], [0], [0, 0, 1, 0], [], []>} : vector<8x4xbf16>, vector<8x4xbf16>, vector<8x8xf32> -> vector<8x8xf32>
    %cst_17 = arith.constant dense<0xFF800000> : vector<8xf32>
    %57 = vector.multi_reduction <maximumf>, %56, %cst_17 [1] : vector<8x8xf32> to vector<8xf32>
    %58 = vector.shape_cast %57 : vector<8xf32> to vector<8x1xf32>
    %59 = vector.broadcast %58 : vector<8x1xf32> to vector<8x8xf32>
    %60 = arith.subf %56, %59 : vector<8x8xf32>
    %61 = math.exp %60 : vector<8x8xf32>
    %cst_18 = arith.constant dense<0.000000e+00> : vector<8xf32>
    %62 = vector.multi_reduction <add>, %61, %cst_18 [1] : vector<8x8xf32> to vector<8xf32>
    %63 = vector.shape_cast %62 : vector<8xf32> to vector<8x1xf32>
    %64 = tpu.reciprocal %63 {approx = true} : vector<8x1xf32> -> vector<8x1xf32>
    %65 = vector.broadcast %64 : vector<8x1xf32> to vector<8x8xf32>
    %66 = arith.mulf %61, %65 : vector<8x8xf32>
    %67 = arith.truncf %66 : vector<8x8xf32> to vector<8x8xbf16>
    %cst_19 = arith.constant dense<0.000000e+00> : vector<8x4xf32>
    %68 = tpu.matmul %67, %55, %cst_19 {dimension_numbers = #tpu.dot_dimension_numbers<[1], [0], [0], [1], [0, 0, 1, 1], [], []>} : vector<8x8xbf16>, vector<8x4xbf16>, vector<8x4xf32> -> vector<8x4xf32>
    %69 = vector.extract_strided_slice %4 {offsets = [0, 16], sizes = [8, 4], strides = [1, 1]} : vector<8x96xbf16> to vector<8x4xbf16>
    %70 = vector.extract_strided_slice %4 {offsets = [0, 48], sizes = [8, 4], strides = [1, 1]} : vector<8x96xbf16> to vector<8x4xbf16>
    %71 = vector.extract_strided_slice %4 {offsets = [0, 80], sizes = [8, 4], strides = [1, 1]} : vector<8x96xbf16> to vector<8x4xbf16>
    %cst_20 = arith.constant dense<0.000000e+00> : vector<8x8xf32>
    %72 = tpu.matmul %69, %70, %cst_20 {dimension_numbers = #tpu.dot_dimension_numbers<[1], [1], [0], [0], [0, 0, 1, 0], [], []>} : vector<8x4xbf16>, vector<8x4xbf16>, vector<8x8xf32> -> vector<8x8xf32>
    %cst_21 = arith.constant dense<0xFF800000> : vector<8xf32>
    %73 = vector.multi_reduction <maximumf>, %72, %cst_21 [1] : vector<8x8xf32> to vector<8xf32>
    %74 = vector.shape_cast %73 : vector<8xf32> to vector<8x1xf32>
    %75 = vector.broadcast %74 : vector<8x1xf32> to vector<8x8xf32>
    %76 = arith.subf %72, %75 : vector<8x8xf32>
    %77 = math.exp %76 : vector<8x8xf32>
    %cst_22 = arith.constant dense<0.000000e+00> : vector<8xf32>
    %78 = vector.multi_reduction <add>, %77, %cst_22 [1] : vector<8x8xf32> to vector<8xf32>
    %79 = vector.shape_cast %78 : vector<8xf32> to vector<8x1xf32>
    %80 = tpu.reciprocal %79 {approx = true} : vector<8x1xf32> -> vector<8x1xf32>
    %81 = vector.broadcast %80 : vector<8x1xf32> to vector<8x8xf32>
    %82 = arith.mulf %77, %81 : vector<8x8xf32>
    %83 = arith.truncf %82 : vector<8x8xf32> to vector<8x8xbf16>
    %cst_23 = arith.constant dense<0.000000e+00> : vector<8x4xf32>
    %84 = tpu.matmul %83, %71, %cst_23 {dimension_numbers = #tpu.dot_dimension_numbers<[1], [0], [0], [1], [0, 0, 1, 1], [], []>} : vector<8x8xbf16>, vector<8x4xbf16>, vector<8x4xf32> -> vector<8x4xf32>
    %85 = vector.extract_strided_slice %4 {offsets = [0, 20], sizes = [8, 4], strides = [1, 1]} : vector<8x96xbf16> to vector<8x4xbf16>
    %86 = vector.extract_strided_slice %4 {offsets = [0, 52], sizes = [8, 4], strides = [1, 1]} : vector<8x96xbf16> to vector<8x4xbf16>
    %87 = vector.extract_strided_slice %4 {offsets = [0, 84], sizes = [8, 4], strides = [1, 1]} : vector<8x96xbf16> to vector<8x4xbf16>
    %cst_24 = arith.constant dense<0.000000e+00> : vector<8x8xf32>
    %88 = tpu.matmul %85, %86, %cst_24 {dimension_numbers = #tpu.dot_dimension_numbers<[1], [1], [0], [0], [0, 0, 1, 0], [], []>} : vector<8x4xbf16>, vector<8x4xbf16>, vector<8x8xf32> -> vector<8x8xf32>
    %cst_25 = arith.constant dense<0xFF800000> : vector<8xf32>
    %89 = vector.multi_reduction <maximumf>, %88, %cst_25 [1] : vector<8x8xf32> to vector<8xf32>
    %90 = vector.shape_cast %89 : vector<8xf32> to vector<8x1xf32>
    %91 = vector.broadcast %90 : vector<8x1xf32> to vector<8x8xf32>
    %92 = arith.subf %88, %91 : vector<8x8xf32>
    %93 = math.exp %92 : vector<8x8xf32>
    %cst_26 = arith.constant dense<0.000000e+00> : vector<8xf32>
    %94 = vector.multi_reduction <add>, %93, %cst_26 [1] : vector<8x8xf32> to vector<8xf32>
    %95 = vector.shape_cast %94 : vector<8xf32> to vector<8x1xf32>
    %96 = tpu.reciprocal %95 {approx = true} : vector<8x1xf32> -> vector<8x1xf32>
    %97 = vector.broadcast %96 : vector<8x1xf32> to vector<8x8xf32>
    %98 = arith.mulf %93, %97 : vector<8x8xf32>
    %99 = arith.truncf %98 : vector<8x8xf32> to vector<8x8xbf16>
    %cst_27 = arith.constant dense<0.000000e+00> : vector<8x4xf32>
    %100 = tpu.matmul %99, %87, %cst_27 {dimension_numbers = #tpu.dot_dimension_numbers<[1], [0], [0], [1], [0, 0, 1, 1], [], []>} : vector<8x8xbf16>, vector<8x4xbf16>, vector<8x4xf32> -> vector<8x4xf32>
    %101 = vector.extract_strided_slice %4 {offsets = [0, 24], sizes = [8, 4], strides = [1, 1]} : vector<8x96xbf16> to vector<8x4xbf16>
    %102 = vector.extract_strided_slice %4 {offsets = [0, 56], sizes = [8, 4], strides = [1, 1]} : vector<8x96xbf16> to vector<8x4xbf16>
    %103 = vector.extract_strided_slice %4 {offsets = [0, 88], sizes = [8, 4], strides = [1, 1]} : vector<8x96xbf16> to vector<8x4xbf16>
    %cst_28 = arith.constant dense<0.000000e+00> : vector<8x8xf32>
    %104 = tpu.matmul %101, %102, %cst_28 {dimension_numbers = #tpu.dot_dimension_numbers<[1], [1], [0], [0], [0, 0, 1, 0], [], []>} : vector<8x4xbf16>, vector<8x4xbf16>, vector<8x8xf32> -> vector<8x8xf32>
    %cst_29 = arith.constant dense<0xFF800000> : vector<8xf32>
    %105 = vector.multi_reduction <maximumf>, %104, %cst_29 [1] : vector<8x8xf32> to vector<8xf32>
    %106 = vector.shape_cast %105 : vector<8xf32> to vector<8x1xf32>
    %107 = vector.broadcast %106 : vector<8x1xf32> to vector<8x8xf32>
    %108 = arith.subf %104, %107 : vector<8x8xf32>
    %109 = math.exp %108 : vector<8x8xf32>
    %cst_30 = arith.constant dense<0.000000e+00> : vector<8xf32>
    %110 = vector.multi_reduction <add>, %109, %cst_30 [1] : vector<8x8xf32> to vector<8xf32>
    %111 = vector.shape_cast %110 : vector<8xf32> to vector<8x1xf32>
    %112 = tpu.reciprocal %111 {approx = true} : vector<8x1xf32> -> vector<8x1xf32>
    %113 = vector.broadcast %112 : vector<8x1xf32> to vector<8x8xf32>
    %114 = arith.mulf %109, %113 : vector<8x8xf32>
    %115 = arith.truncf %114 : vector<8x8xf32> to vector<8x8xbf16>
    %cst_31 = arith.constant dense<0.000000e+00> : vector<8x4xf32>
    %116 = tpu.matmul %115, %103, %cst_31 {dimension_numbers = #tpu.dot_dimension_numbers<[1], [0], [0], [1], [0, 0, 1, 1], [], []>} : vector<8x8xbf16>, vector<8x4xbf16>, vector<8x4xf32> -> vector<8x4xf32>
    %117 = vector.extract_strided_slice %4 {offsets = [0, 28], sizes = [8, 4], strides = [1, 1]} : vector<8x96xbf16> to vector<8x4xbf16>
    %118 = vector.extract_strided_slice %4 {offsets = [0, 60], sizes = [8, 4], strides = [1, 1]} : vector<8x96xbf16> to vector<8x4xbf16>
    %119 = vector.extract_strided_slice %4 {offsets = [0, 92], sizes = [8, 4], strides = [1, 1]} : vector<8x96xbf16> to vector<8x4xbf16>
    %cst_32 = arith.constant dense<0.000000e+00> : vector<8x8xf32>
    %120 = tpu.matmul %117, %118, %cst_32 {dimension_numbers = #tpu.dot_dimension_numbers<[1], [1], [0], [0], [0, 0, 1, 0], [], []>} : vector<8x4xbf16>, vector<8x4xbf16>, vector<8x8xf32> -> vector<8x8xf32>
    %cst_33 = arith.constant dense<0xFF800000> : vector<8xf32>
    %121 = vector.multi_reduction <maximumf>, %120, %cst_33 [1] : vector<8x8xf32> to vector<8xf32>
    %122 = vector.shape_cast %121 : vector<8xf32> to vector<8x1xf32>
    %123 = vector.broadcast %122 : vector<8x1xf32> to vector<8x8xf32>
    %124 = arith.subf %120, %123 : vector<8x8xf32>
    %125 = math.exp %124 : vector<8x8xf32>
    %cst_34 = arith.constant dense<0.000000e+00> : vector<8xf32>
    %126 = vector.multi_reduction <add>, %125, %cst_34 [1] : vector<8x8xf32> to vector<8xf32>
    %127 = vector.shape_cast %126 : vector<8xf32> to vector<8x1xf32>
    %128 = tpu.reciprocal %127 {approx = true} : vector<8x1xf32> -> vector<8x1xf32>
    %129 = vector.broadcast %128 : vector<8x1xf32> to vector<8x8xf32>
    %130 = arith.mulf %125, %129 : vector<8x8xf32>
    %131 = arith.truncf %130 : vector<8x8xf32> to vector<8x8xbf16>
    %cst_35 = arith.constant dense<0.000000e+00> : vector<8x4xf32>
    %132 = tpu.matmul %131, %119, %cst_35 {dimension_numbers = #tpu.dot_dimension_numbers<[1], [0], [0], [1], [0, 0, 1, 1], [], []>} : vector<8x8xbf16>, vector<8x4xbf16>, vector<8x4xf32> -> vector<8x4xf32>
    %133 = tpu.concatenate %18, %34, %50, %66, %82, %98, %114, %130 in 1 : vector<8x8xf32>, vector<8x8xf32>, vector<8x8xf32>, vector<8x8xf32>, vector<8x8xf32>, vector<8x8xf32>, vector<8x8xf32>, vector<8x8xf32> -> vector<8x64xf32>
    %c0_36 = arith.constant 0 : index
    %c0_37 = arith.constant 0 : index
    %c0_38 = arith.constant 0 : index
    %134 = vector.load %arg6[%c0_36, %c0_37, %c0_38] : memref<1x8x64xf32, #tpu.memory_space<vmem>>, vector<1x8x64xf32>
    %135 = vector.shape_cast %134 : vector<1x8x64xf32> to vector<8x64xf32>
    %136 = vector.shape_cast %133 : vector<8x64xf32> to vector<1x8x64xf32>
    tpu.vector_store %arg6[%c0_36, %c0_37, %c0_38], %136 {strides = array<i32>} : memref<1x8x64xf32, #tpu.memory_space<vmem>>, vector<1x8x64xf32>,
    %137 = tpu.concatenate %20, %36, %52, %68, %84, %100, %116, %132 in 1 : vector<8x4xf32>, vector<8x4xf32>, vector<8x4xf32>, vector<8x4xf32>, vector<8x4xf32>, vector<8x4xf32>, vector<8x4xf32>, vector<8x4xf32> -> vector<8x32xf32>
    %138 = arith.truncf %137 : vector<8x32xf32> to vector<8x32xbf16>
    %c0_39 = arith.constant 0 : index
    %c0_40 = arith.constant 0 : index
    %139 = vector.load %arg3[%c0_39, %c0_40] : memref<32x32xbf16, #tpu.memory_space<vmem>>, vector<32x32xbf16>
    %cst_41 = arith.constant dense<0.000000e+00> : vector<8x32xf32>
    %140 = tpu.matmul %138, %139, %cst_41 {dimension_numbers = #tpu.dot_dimension_numbers<[1], [0], [0], [1], [0, 0, 1, 1], [], []>} : vector<8x32xbf16>, vector<32x32xbf16>, vector<8x32xf32> -> vector<8x32xf32>
    %c0_42 = arith.constant 0 : index
    %c0_43 = arith.constant 0 : index
    %141 = vector.load %arg4[%c0_42, %c0_43] : memref<1x32xf32, #tpu.memory_space<vmem>>, vector<1x32xf32>
    %142 = vector.broadcast %141 : vector<1x32xf32> to vector<8x32xf32>
    %143 = arith.addf %140, %142 : vector<8x32xf32>
    %c0_44 = arith.constant 0 : index
    %c0_45 = arith.constant 0 : index
    %c0_46 = arith.constant 0 : index
    %144 = vector.load %arg5[%c0_44, %c0_45, %c0_46] : memref<1x8x32xf32, #tpu.memory_space<vmem>>, vector<1x8x32xf32>
    %145 = vector.shape_cast %144 : vector<1x8x32xf32> to vector<8x32xf32>
    %146 = vector.shape_cast %143 : vector<8x32xf32> to vector<1x8x32xf32>
    tpu.vector_store %arg5[%c0_44, %c0_45, %c0_46], %146 {strides = array<i32>} : memref<1x8x32xf32, #tpu.memory_space<vmem>>, vector<1x8x32xf32>,
    return
  }
  func.func @transform_0(%arg0: i32) -> (i32, i32, i32) {
    %c0_i32 = arith.constant 0 : i32
    %c0_i32_0 = arith.constant 0 : i32
    %c0_i32_1 = arith.constant 0 : i32
    return %arg0, %c0_i32, %c0_i32_0 : i32, i32, i32
  }
  func.func @transform_1(%arg0: i32) -> (i32, i32) {
    %c0_i32 = arith.constant 0 : i32
    %c0_i32_0 = arith.constant 0 : i32
    %c0_i32_1 = arith.constant 0 : i32
    return %c0_i32, %c0_i32_0 : i32, i32
  }
  func.func @transform_2(%arg0: i32) -> (i32, i32) {
    %c0_i32 = arith.constant 0 : i32
    %c0_i32_0 = arith.constant 0 : i32
    %c0_i32_1 = arith.constant 0 : i32
    return %c0_i32, %c0_i32_0 : i32, i32
  }
  func.func @transform_3(%arg0: i32) -> (i32, i32) {
    %c0_i32 = arith.constant 0 : i32
    %c0_i32_0 = arith.constant 0 : i32
    %c0_i32_1 = arith.constant 0 : i32
    return %c0_i32, %c0_i32_0 : i32, i32
  }
  func.func @transform_4(%arg0: i32) -> (i32, i32, i32) {
    %c0_i32 = arith.constant 0 : i32
    %c0_i32_0 = arith.constant 0 : i32
    %c0_i32_1 = arith.constant 0 : i32
    return %arg0, %c0_i32, %c0_i32_0 : i32, i32, i32
  }
  func.func @transform_5(%arg0: i32) -> (i32, i32, i32) {
    %c0_i32 = arith.constant 0 : i32
    %c0_i32_0 = arith.constant 0 : i32
    %c0_i32_1 = arith.constant 0 : i32
    return %arg0, %c0_i32, %c0_i32_0 : i32, i32, i32
  }
}

</mosaic_0001>

<llo_original>
// kernel: tpu_custom_call.1
$region0: #{tpu_custom_call.1}
  #allocation0 [shape = 'u32[]', space=smem, size = 0x4, offset = 0x4, fixed_abs, tag = 'smem constant byte address 0x4 - core index']
  #allocation1 [shape = 'u32[144,128]{1,0:T(1,128)}', space=vmem, size = 0x12000, scoped, tag = 'internal scratch']
  %s0 = inlined_call_operand.hbm [shape: bf16[2,8,32], index: 0, kind: input, shape index: {}]
  %s1 = inlined_call_operand.hbm [shape: bf16[32,96], index: 1, kind: input, shape index: {}]
  %s2 = inlined_call_operand.hbm [shape: bf16[32,32], index: 2, kind: input, shape index: {}]
  %s3 = inlined_call_operand.vmem [shape: f32[1,32], index: 3, kind: input, shape index: {}]
  %s4 = inlined_call_operand.hbm [shape: f32[2,8,32], index: 4, kind: output, shape index: {0}]
  %s5 = inlined_call_operand.hbm [shape: f32[2,8,64], index: 5, kind: output, shape index: {1}]
  %6 = xla_tuple %s4, %s5
  %s7 = sld [smem:[#allocation0]]
  $region69: #{tpu_custom_call.1} parent=0
    _
  %s9 = ssub.s32 1, %s7
  %s10 = scalar_select 0, %s9, %s7
  $region1: #{tpu_custom_call.1} parent=0
    #allocation2 [shape = 'u8[4096]{0}', space=vmem, size = 0x1000, scoped, tag = 'input window, operand 0']
    #allocation3 [shape = 's32[2]{0}', space=sflag, size = 0x8, scoped, tag = 'scoped memory for tpu_custom_call.1']
    #allocation4 [shape = 's32[2]{0}', space=sflag, size = 0x8, scoped, tag = 'scoped memory for tpu_custom_call.1']
    #allocation5 [shape = 'u8[8192]{0}', space=vmem, size = 0x2000, scoped, tag = 'input window, operand 1, single buffered']
    #allocation6 [shape = 's32[1]{0}', space=sflag, size = 0x4, scoped, tag = 'scoped memory for tpu_custom_call.1']
    #allocation7 [shape = 'u8[8192]{0}', space=vmem, size = 0x2000, scoped, tag = 'input window, operand 2, single buffered']
    #allocation8 [shape = 'u8[8192]{0}', space=vmem, size = 0x2000, scoped, tag = 'output window, operand 0']
    #allocation9 [shape = 'u8[8192]{0}', space=vmem, size = 0x2000, scoped, tag = 'output window, operand 1']
    #allocation10 [shape = 's32[2]{0}', space=sflag, size = 0x8, scoped, tag = 'scoped memory for tpu_custom_call.1']
    %11 = vsyncpa [#allocation3], 0
    %s12 = scalar_lea.sflag [#allocation3], 1
    %13 = vsyncpa %s12, 0
    %14 = vsyncpa [#allocation6], 0
    %15 = vsyncpa [#allocation4], 0
    %s16 = scalar_lea.sflag [#allocation4], 1
    %17 = vsyncpa %s16, 0
    %18 = vsyncpa [#allocation10], 0
    %s19 = scalar_lea.sflag [#allocation10], 1
    %20 = vsyncpa %s19, 0
    loop: start=0, step=1, limit=4
    $region2: #{tpu_custom_call.1} parent=1 // loop_pre_header
      _
    $region3: #{tpu_custom_call.1} parent=1 // loop_header
      %s22 = sphi 0, %s26
      %p23 = scmp.ge.s32.totalorder %s22, 4
      %s32 = sphi 0, %s34
      %s35 = sphi 0, %s32
      %s36 = sphi 0, %s35
      %s52 = sphi 0, %s36
      %s56 = sphi 0, %s56
      %s58 = sphi 0, %s56
      %s59 = sphi 0, %s58
      %s73 = sphi 0, %s59
      %s77 = sphi 0, %s77
      %s79 = sphi 0, %s77
      %s80 = sphi 0, %s79
      %s94 = sphi 0, %s80
      %s98 = sphi 0, %s98
      %s100 = sphi 0, %s98
      %s101 = sphi 0, %s100
      %s115 = sphi 0, %s101
      %s121 = sphi 0, %s123
      %s124 = sphi 0, %s121
      %s125 = sphi 0, %s124
      %s141 = sphi 0, %s125
      %s147 = sphi 0, %s149
      %s150 = sphi 0, %s147
      %s151 = sphi 0, %s150
      %s167 = sphi 0, %s151
    $region4: #{tpu_custom_call.1} parent=1 // loop_header_branch
      %25 = sbr.rel (%p23) target = $region8
    $region5: #{tpu_custom_call.1} parent=1 // loop_body
      %s27 = ssub.s32 %s22, 1
      %s28 = ssub.s32 %s22, 2
      %s29 = sadd.s32 %s22, 1
      %s30 = ssub.s32 %s22, %s29
      %p31 = scmp.eq.s32.totalorder %s30, 0
      %s33 = sadd.s32 %s32, 1
      %s34 = scalar_select %p31, %s32, %s33
      %p37 = pneg %p31
      %p38 = scmp.eq.s32.totalorder %s22, 1
      %p39 = por %p37, %p38
      %p40 = scmp.ne.s32.totalorder %s32, %s35
      %p41 = scmp.eq.s32.totalorder %s22, 0
      %p42 = por %p40, %p41
      %p43 = scmp.ne.s32.totalorder %s32, %s35
      %p44 = scmp.eq.s32.totalorder %s27, 1
      %p45 = por %p43, %p44
      %p46 = scmp.ne.s32.totalorder %s35, %s36
      %p47 = scmp.eq.s32.totalorder %s27, 0
      %p48 = por %p46, %p47
      %p49 = scmp.ne.s32.totalorder %s35, %s36
      %p50 = scmp.eq.s32.totalorder %s28, 1
      %p51 = por %p49, %p50
      %p53 = scmp.ne.s32.totalorder %s36, %s52
      %p54 = scmp.eq.s32.totalorder %s28, 0
      %p55 = por %p53, %p54
      %s57 = sadd.s32 %s56, 1
      %p60 = scmp.eq.s32.totalorder %s22, 1
      %p61 = scmp.ne.s32.totalorder %s56, %s58
      %p62 = scmp.eq.s32.totalorder %s22, 0
      %p63 = por %p61, %p62
      %p64 = scmp.ne.s32.totalorder %s56, %s58
      %p65 = scmp.eq.s32.totalorder %s27, 1
      %p66 = por %p64, %p65
      %p67 = scmp.ne.s32.totalorder %s58, %s59
      %p68 = scmp.eq.s32.totalorder %s27, 0
      %p69 = por %p67, %p68
      %p70 = scmp.ne.s32.totalorder %s58, %s59
      %p71 = scmp.eq.s32.totalorder %s28, 1
      %p72 = por %p70, %p71
      %p74 = scmp.ne.s32.totalorder %s59, %s73
      %p75 = scmp.eq.s32.totalorder %s28, 0
      %p76 = por %p74, %p75
      %s78 = sadd.s32 %s77, 1
      %p81 = scmp.eq.s32.totalorder %s22, 1
      %p82 = scmp.ne.s32.totalorder %s77, %s79
      %p83 = scmp.eq.s32.totalorder %s22, 0
      %p84 = por %p82, %p83
      %p85 = scmp.ne.s32.totalorder %s77, %s79
      %p86 = scmp.eq.s32.totalorder %s27, 1
      %p87 = por %p85, %p86
      %p88 = scmp.ne.s32.totalorder %s79, %s80
      %p89 = scmp.eq.s32.totalorder %s27, 0
      %p90 = por %p88, %p89
      %p91 = scmp.ne.s32.totalorder %s79, %s80
      %p92 = scmp.eq.s32.totalorder %s28, 1
      %p93 = por %p91, %p92
      %p95 = scmp.ne.s32.totalorder %s80, %s94
      %p96 = scmp.eq.s32.totalorder %s28, 0
      %p97 = por %p95, %p96
      %s99 = sadd.s32 %s98, 1
      %p102 = scmp.eq.s32.totalorder %s22, 1
      %p103 = scmp.ne.s32.totalorder %s98, %s100
      %p104 = scmp.eq.s32.totalorder %s22, 0
      %p105 = por %p103, %p104
      %p106 = scmp.ne.s32.totalorder %s98, %s100
      %p107 = scmp.eq.s32.totalorder %s27, 1
      %p108 = por %p106, %p107
      %p109 = scmp.ne.s32.totalorder %s100, %s101
      %p110 = scmp.eq.s32.totalorder %s27, 0
      %p111 = por %p109, %p110
      %p112 = scmp.ne.s32.totalorder %s100, %s101
      %p113 = scmp.eq.s32.totalorder %s28, 1
      %p114 = por %p112, %p113
      %p116 = scmp.ne.s32.totalorder %s101, %s115
      %p117 = scmp.eq.s32.totalorder %s28, 0
      %p118 = por %p116, %p117
      %s119 = ssub.s32 %s22, %s29
      %p120 = scmp.eq.s32.totalorder %s119, 0
      %s122 = sadd.s32 %s121, 1
      %s123 = scalar_select %p120, %s121, %s122
      %p126 = pneg %p120
      %p127 = scmp.eq.s32.totalorder %s22, 1
      %p128 = por %p126, %p127
      %p129 = scmp.ne.s32.totalorder %s121, %s124
      %p130 = scmp.eq.s32.totalorder %s22, 0
      %p131 = por %p129, %p130
      %p132 = scmp.ne.s32.totalorder %s121, %s124
      %p133 = scmp.eq.s32.totalorder %s27, 1
      %p134 = por %p132, %p133
      %p135 = scmp.ne.s32.totalorder %s124, %s125
      %p136 = scmp.eq.s32.totalorder %s27, 0
      %p137 = por %p135, %p136
      %p138 = scmp.ne.s32.totalorder %s124, %s125
      %p139 = scmp.eq.s32.totalorder %s28, 1
      %p140 = por %p138, %p139
      %p142 = scmp.ne.s32.totalorder %s125, %s141
      %p143 = scmp.eq.s32.totalorder %s28, 0
      %p144 = por %p142, %p143
      %s145 = ssub.s32 %s22, %s29
      %p146 = scmp.eq.s32.totalorder %s145, 0
      %s148 = sadd.s32 %s147, 1
      %s149 = scalar_select %p146, %s147, %s148
      %p152 = pneg %p146
      %p153 = scmp.eq.s32.totalorder %s22, 1
      %p154 = por %p152, %p153
      %p155 = scmp.ne.s32.totalorder %s147, %s150
      %p156 = scmp.eq.s32.totalorder %s22, 0
      %p157 = por %p155, %p156
      %p158 = scmp.ne.s32.totalorder %s147, %s150
      %p159 = scmp.eq.s32.totalorder %s27, 1
      %p160 = por %p158, %p159
      %p161 = scmp.ne.s32.totalorder %s150, %s151
      %p162 = scmp.eq.s32.totalorder %s27, 0
      %p163 = por %p161, %p162
      %p164 = scmp.ne.s32.totalorder %s150, %s151
      %p165 = scmp.eq.s32.totalorder %s28, 1
      %p166 = por %p164, %p165
      %p168 = scmp.ne.s32.totalorder %s151, %s167
      %p169 = scmp.eq.s32.totalorder %s28, 0
      %p170 = por %p168, %p169
      %p171 = scmp.le.s32.totalorder 1, %s22
      %p172 = scmp.lt.s32.totalorder %s22, 3
      %p173 = pnand %p171, %p172
      %p174 = pneg %p173
      // Predicated region
      $region9: #{tpu_custom_call.1} parent=5 // pred_check
        _
      $region10: #{tpu_custom_call.1} parent=5 // pred_check_branch
        %176 = sbr.rel (%p173) target = $region12
      $region11: #{tpu_custom_call.1} parent=5 // pred_region
        %s177 = ssub.s32 %s22, 1
        // Predicated region
        $region13: #{tpu_custom_call.1} parent=11 // pred_check
          %p178 = pneg %p69
        $region14: #{tpu_custom_call.1} parent=11 // pred_check_branch
          %180 = sbr.rel (%p178) target = $region16
        $region15: #{tpu_custom_call.1} parent=11 // pred_region
          %s182 = ssub.s32 256, 256
          %183 = vsyncadd [#allocation6], %s182
          %s184 = sshll.u32 [#allocation5], 4
          %s185 = int_to_ptr.vmem [resolvable:$true] %s184
          %190 = dma.hbm_to_vmem [thread:$0]  %s1, 256, %s185, [#allocation6], 64, 64, 4
        $region16: #{tpu_custom_call.1} parent=11 // pred_fallthru
          _
        // Predicated region
        $region17: #{tpu_custom_call.1} parent=11 // pred_check
          %p191 = pneg %p90
        $region18: #{tpu_custom_call.1} parent=11 // pred_check_branch
          %193 = sbr.rel (%p191) target = $region20
        $region19: #{tpu_custom_call.1} parent=11 // pred_region
          %s195 = ssub.s32 256, 256
          %196 = vsyncadd [#allocation6], %s195
          %s197 = sshll.u32 [#allocation7], 4
          %s198 = int_to_ptr.vmem [resolvable:$true] %s197
          %203 = dma.hbm_to_vmem [thread:$0]  %s2, 256, %s198, [#allocation6], 64, 64, 4
        $region20: #{tpu_custom_call.1} parent=11 // pred_fallthru
          _
        // Predicated region
        $region21: #{tpu_custom_call.1} parent=11 // pred_check
          %p204 = pneg %p111
        $region22: #{tpu_custom_call.1} parent=11 // pred_check_branch
          %206 = sbr.rel (%p204) target = $region24
        $region23: #{tpu_custom_call.1} parent=11 // pred_region
          _
        $region24: #{tpu_custom_call.1} parent=11 // pred_fallthru
          _
      $region12: #{tpu_custom_call.1} parent=5 // pred_fallthru
        _
      %p207 = scmp.lt.s32.totalorder %s22, 2
      // Predicated region
      $region25: #{tpu_custom_call.1} parent=5 // pred_check
        %p208 = pneg %p207
      $region26: #{tpu_custom_call.1} parent=5 // pred_check_branch
        %210 = sbr.rel (%p208) target = $region28
      $region27: #{tpu_custom_call.1} parent=5 // pred_region
        // Predicated region
        $region29: #{tpu_custom_call.1} parent=27 // pred_check
          %p211 = pneg %p42
        $region30: #{tpu_custom_call.1} parent=27 // pred_check_branch
          %213 = sbr.rel (%p211) target = $region32
        $region31: #{tpu_custom_call.1} parent=27 // pred_region
          %s214 = sand.u32 %s32, 1
          %s215 = scalar_lea.sflag [#allocation3], %s214
          %s216 = sand.u32 %s32, 1
          %s217 = smul.addr %s216, 4
          %s218 = scalar_lea.vmem [#allocation2], %s217
          %s220 = ssub.s32 64, 64
          %221 = vsyncadd %s215, %s220
          %s222 = smul.addr %s22, 64
          %s223 = scalar_lea.hbm %s0, %s222
          %s225 = sshll.u32 %s218, 4
          %s226 = int_to_ptr.vmem [resolvable:$true] %s225
          %228 = dma.hbm_to_vmem [thread:$0]  %s223, 64, %s226, %s215
        $region32: #{tpu_custom_call.1} parent=27 // pred_fallthru
          _
      $region28: #{tpu_custom_call.1} parent=5 // pred_fallthru
        _
      %p229 = scmp.le.s32.totalorder 1, %s22
      %p230 = scmp.lt.s32.totalorder %s22, 3
      %p231 = pnand %p229, %p230
      %p232 = pneg %p231
      // Predicated region
      $region33: #{tpu_custom_call.1} parent=5 // pred_check
        _
      $region34: #{tpu_custom_call.1} parent=5 // pred_check_branch
        %234 = sbr.rel (%p231) target = $region36
      $region35: #{tpu_custom_call.1} parent=5 // pred_region
        %s235 = ssub.s32 %s22, 1
        %s236 = sand.u32 %s35, 1
        %s237 = scalar_lea.sflag [#allocation3], %s236
        %s238 = sand.u32 %s35, 1
        %s239 = smul.addr %s238, 4
        %s240 = scalar_lea.vmem [#allocation2], %s239
        // Predicated region
        $region37: #{tpu_custom_call.1} parent=35 // pred_check
          %p241 = pneg %p48
        $region38: #{tpu_custom_call.1} parent=35 // pred_check_branch
          %243 = sbr.rel (%p241) target = $region40
        $region39: #{tpu_custom_call.1} parent=35 // pred_region
          %244 = dma.done %s237, 64
        $region40: #{tpu_custom_call.1} parent=35 // pred_fallthru
          _
        // Predicated region
        $region41: #{tpu_custom_call.1} parent=35 // pred_check
          %p245 = pneg %p69
        $region42: #{tpu_custom_call.1} parent=35 // pred_check_branch
          %247 = sbr.rel (%p245) target = $region44
        $region43: #{tpu_custom_call.1} parent=35 // pred_region
          %248 = dma.done [#allocation6], 256
        $region44: #{tpu_custom_call.1} parent=35 // pred_fallthru
          _
        // Predicated region
        $region45: #{tpu_custom_call.1} parent=35 // pred_check
          %p249 = pneg %p90
        $region46: #{tpu_custom_call.1} parent=35 // pred_check_branch
          %251 = sbr.rel (%p249) target = $region48
        $region47: #{tpu_custom_call.1} parent=35 // pred_region
          %252 = dma.done [#allocation6], 256
        $region48: #{tpu_custom_call.1} parent=35 // pred_fallthru
          _
        %s253 = sand.u32 %s35, 1
        %s254 = scalar_lea.sflag [#allocation3], %s253
        %s255 = sand.u32 %s35, 1
        %s256 = smul.addr %s255, 4
        %s257 = scalar_lea.vmem [#allocation2], %s256
        %p258 = pneg %p48
        %p259 = pneg %p45
        %p260 = pneg %p69
        %p261 = pneg %p66
        %p262 = pneg %p90
        %p263 = pneg %p87
        %p264 = pneg %p111
        %p265 = pneg %p108
        %p266 = pneg %p137
        %p267 = pneg %p134
        %s268 = sand.u32 %s124, 1
        %s269 = scalar_lea.sflag [#allocation4], %s268
        %s270 = sand.u32 %s124, 1
        %s271 = smul.addr %s270, 8
        %s272 = scalar_lea.vmem [#allocation8], %s271
        %p273 = pneg %p163
        %p274 = pneg %p160
        %s275 = sand.u32 %s150, 1
        %s276 = scalar_lea.sflag [#allocation10], %s275
        %s277 = sand.u32 %s150, 1
        %s278 = smul.addr %s277, 8
        %s279 = scalar_lea.vmem [#allocation9], %s278
        %v281 = vld [vmem:[%s240] sm:$0xf]
        %v282 = vld [vmem:[#allocation5] sm:$0xf]
        %v283 = vld [vmem:[#allocation5 + $0x4] sm:$0xf]
        %v284 = vld [vmem:[#allocation5 + $0x8] sm:$0xf]
        %v285 = vld [vmem:[#allocation5 + $0xc] sm:$0xf]
        %v290 = vunpack.c.l.b16 %v282
        %v291 = vunpack.c.l.b16 %v283
        %v292 = vunpack.c.l.b16 %v284
        %v293 = vunpack.c.l.b16 %v285
        %v294 = vpack.c.b16 %v291, %v290
        %v295 = vpack.c.b16 %v293, %v292
        %vm298 = vcmask 261120
        %v300 = vsel %vm298, %v281, 0
        %302 = vmatprep.subr.bf16.mxu0 0
        %303 = vmatpush1.bf16.msra.mxu0 %v294
        %304 = vmatprep.subr.bf16.mxu0 0
        %305 = vmatpush1.bf16.msra.mxu0 %v295
        %306 = vmatprep.subr.bf16.mxu0 0
        %307 = vmatpush1.bf16.msra.mxu0 0
        %308 = vmatprep.subr.bf16.mxu0 0
        %309 = vmatpush1.bf16.msra.mxu0 0
        %310 = vmatprep.subr.bf16.mxu0 0
        %311 = vmatpush1.bf16.msra.mxu0 0
        %312 = vmatprep.subr.bf16.mxu0 0
        %313 = vmatpush1.bf16.msra.mxu0 0
        %314 = vmatprep.subr.bf16.mxu0 0
        %315 = vmatpush1.bf16.msra.mxu0 0
        %316 = vmatprep.subr.bf16.mxu0 0
        %317 = vmatpush1.bf16.msra.mxu0 0
        %318 = vmatprep.subr.bf16.mxu0 0
        %319 = vmatpush1.bf16.msra.mxu0 0
        %320 = vmatprep.subr.bf16.mxu0 0
        %321 = vmatpush1.bf16.msra.mxu0 0
        %322 = vmatprep.subr.bf16.mxu0 0
        %323 = vmatpush1.bf16.msra.mxu0 0
        %324 = vmatprep.subr.bf16.mxu0 0
        %325 = vmatpush1.bf16.msra.mxu0 0
        %326 = vmatprep.subr.bf16.mxu0 0
        %327 = vmatpush1.bf16.msra.mxu0 0
        %328 = vmatprep.subr.bf16.mxu0 0
        %329 = vmatpush1.bf16.msra.mxu0 0
        %330 = vmatprep.subr.bf16.mxu0 0
        %331 = vmatpush1.bf16.msra.mxu0 0
        %332 = vmatprep.subr.bf16.mxu0 0
        %333 = vmatpush1.bf16.msra.mxu0 0
        %334 = vmatprep.mubr.bf16.mxu0 0
        %335 = vmatmul.mubr.bf16.gmra.mrb[0].mxu0 %v300
        %v336 = vpop.f32.mrb[0].mxu0
        %v337 = vadd.f32 0.0, %v336
        %v338 = vpop.f32.mrb[0].mxu0
        %v339 = vpop.f32.mrb[0].mxu0
        %v340 = vpop.f32.mrb[0].mxu0
        %341 = vdwg.mxu0
        %v342 = vpack.c.bf16 %v337, %v337
        %344 = vrot.lane.b32.xlu0 %v342, 96
        %v345 = vpop.permute.xlu0 %344
        %vm346 = vcmask 31744
        %v348 = vsel %vm346, %v342, 0
        %v351 = vsel %vm346, %v345, 0
        %353 = vmatprep.subr.bf16.mxu0 0
        %354 = vmatpush1.bf16.xpose.msra.mxu0 %v351
        %355 = vmatprep.subr.bf16.mxu0 0
        %356 = vmatpush1.bf16.xpose.msra.mxu0 0
        %357 = vmatprep.subr.bf16.mxu0 0
        %358 = vmatpush1.bf16.xpose.msra.mxu0 0
        %359 = vmatprep.subr.bf16.mxu0 0
        %360 = vmatpush1.bf16.xpose.msra.mxu0 0
        %361 = vmatprep.subr.bf16.mxu0 0
        %362 = vmatpush1.bf16.xpose.msra.mxu0 0
        %363 = vmatprep.subr.bf16.mxu0 0
        %364 = vmatpush1.bf16.xpose.msra.mxu0 0
        %365 = vmatprep.subr.bf16.mxu0 0
        %366 = vmatpush1.bf16.xpose.msra.mxu0 0
        %367 = vmatprep.subr.bf16.mxu0 0
        %368 = vmatpush1.bf16.xpose.msra.mxu0 0
        %369 = vmatprep.subr.bf16.mxu0 0
        %370 = vmatpush1.bf16.xpose.msra.mxu0 0
        %371 = vmatprep.subr.bf16.mxu0 0
        %372 = vmatpush1.bf16.xpose.msra.mxu0 0
        %373 = vmatprep.subr.bf16.mxu0 0
        %374 = vmatpush1.bf16.xpose.msra.mxu0 0
        %375 = vmatprep.subr.bf16.mxu0 0
        %376 = vmatpush1.bf16.xpose.msra.mxu0 0
        %377 = vmatprep.subr.bf16.mxu0 0
        %378 = vmatpush1.bf16.xpose.msra.mxu0 0
        %379 = vmatprep.subr.bf16.mxu0 0
        %380 = vmatpush1.bf16.xpose.msra.mxu0 0
        %381 = vmatprep.subr.bf16.mxu0 0
        %382 = vmatpush1.bf16.xpose.msra.mxu0 0
        %383 = vmatprep.subr.bf16.mxu0 0
        %384 = vmatpush1.bf16.xpose.msra.mxu0 0
        %385 = vmatprep.mubr.bf16.mxu0 0
        %386 = vmatmul.mubr.bf16.gmra.mrb[0].mxu0 %v348
        %v387 = vpop.f32.mrb[0].mxu0
        %v388 = vadd.f32 0.0, %v387
        %v389 = vpop.f32.mrb[0].mxu0
        %v390 = vpop.f32.mrb[0].mxu0
        %v391 = vpop.f32.mrb[0].mxu0
        %392 = vdwg.mxu0
        %vm393 = vcmask 64512
        %v394 = vsel %vm393, %v388, -inf
        %395 = vmax.xlane.f32.xlu0 %v394
        %v396 = vpop.xlane.xlu0 %395
        %v397 = vsub.f32 %v388, %v396
        %v398 = vmul.f32 %v397, 1.442695
        %v399 = vpow.pop %v398
        %v400 = vsel %vm393, %v399, 0.0
        %401 = vadd.xlane.f32.xlu0 %v400
        %v402 = vpop.xlane.xlu0 %401
        %v403 = vrcp.pop %v402
        %v404 = vmul.f32 %v399, %v403
        %v405 = vpack.c.bf16 %v404, %v404
        %406 = vrot.lane.b32.xlu0 %v342, 64
        %v407 = vpop.permute.xlu0 %406
        %v409 = vsel %vm393, %v405, 0
        %vm411 = vcmask 1043456
        %v413 = vsel %vm411, %v407, 0
        %415 = vmatprep.subr.bf16.mxu0 0
        %416 = vmatpush1.bf16.msra.mxu0 %v413
        %417 = vmatprep.subr.bf16.mxu0 0
        %418 = vmatpush1.bf16.msra.mxu0 0
        %419 = vmatprep.subr.bf16.mxu0 0
        %420 = vmatpush1.bf16.msra.mxu0 0
        %421 = vmatprep.subr.bf16.mxu0 0
        %422 = vmatpush1.bf16.msra.mxu0 0
        %423 = vmatprep.subr.bf16.mxu0 0
        %424 = vmatpush1.bf16.msra.mxu0 0
        %425 = vmatprep.subr.bf16.mxu0 0
        %426 = vmatpush1.bf16.msra.mxu0 0
        %427 = vmatprep.subr.bf16.mxu0 0
        %428 = vmatpush1.bf16.msra.mxu0 0
        %429 = vmatprep.subr.bf16.mxu0 0
        %430 = vmatpush1.bf16.msra.mxu0 0
        %431 = vmatprep.subr.bf16.mxu0 0
        %432 = vmatpush1.bf16.msra.mxu0 0
        %433 = vmatprep.subr.bf16.mxu0 0
        %434 = vmatpush1.bf16.msra.mxu0 0
        %435 = vmatprep.subr.bf16.mxu0 0
        %436 = vmatpush1.bf16.msra.mxu0 0
        %437 = vmatprep.subr.bf16.mxu0 0
        %438 = vmatpush1.bf16.msra.mxu0 0
        %439 = vmatprep.subr.bf16.mxu0 0
        %440 = vmatpush1.bf16.msra.mxu0 0
        %441 = vmatprep.subr.bf16.mxu0 0
        %442 = vmatpush1.bf16.msra.mxu0 0
        %443 = vmatprep.subr.bf16.mxu0 0
        %444 = vmatpush1.bf16.msra.mxu0 0
        %445 = vmatprep.subr.bf16.mxu0 0
        %446 = vmatpush1.bf16.msra.mxu0 0
        %447 = vmatprep.mubr.bf16.mxu0 0
        %448 = vmatmul.mubr.bf16.gmra.mrb[0].mxu0 %v409
        %v449 = vpop.f32.mrb[0].mxu0
        %v450 = vadd.f32 0.0, %v449
        %v451 = vpop.f32.mrb[0].mxu0
        %v452 = vpop.f32.mrb[0].mxu0
        %v453 = vpop.f32.mrb[0].mxu0
        %454 = vdwg.mxu0
        %455 = vrot.lane.b32.xlu0 %v342, 124
        %v456 = vpop.permute.xlu0 %455
        %457 = vrot.lane.b32.xlu0 %v342, 92
        %v458 = vpop.permute.xlu0 %457
        %v460 = vsel %vm346, %v456, 0
        %v463 = vsel %vm346, %v458, 0
        %465 = vmatprep.subr.bf16.mxu0 0
        %466 = vmatpush1.bf16.xpose.msra.mxu0 %v463
        %467 = vmatprep.subr.bf16.mxu0 0
        %468 = vmatpush1.bf16.xpose.msra.mxu0 0
        %469 = vmatprep.subr.bf16.mxu0 0
        %470 = vmatpush1.bf16.xpose.msra.mxu0 0
        %471 = vmatprep.subr.bf16.mxu0 0
        %472 = vmatpush1.bf16.xpose.msra.mxu0 0
        %473 = vmatprep.subr.bf16.mxu0 0
        %474 = vmatpush1.bf16.xpose.msra.mxu0 0
        %475 = vmatprep.subr.bf16.mxu0 0
        %476 = vmatpush1.bf16.xpose.msra.mxu0 0
        %477 = vmatprep.subr.bf16.mxu0 0
        %478 = vmatpush1.bf16.xpose.msra.mxu0 0
        %479 = vmatprep.subr.bf16.mxu0 0
        %480 = vmatpush1.bf16.xpose.msra.mxu0 0
        %481 = vmatprep.subr.bf16.mxu0 0
        %482 = vmatpush1.bf16.xpose.msra.mxu0 0
        %483 = vmatprep.subr.bf16.mxu0 0
        %484 = vmatpush1.bf16.xpose.msra.mxu0 0
        %485 = vmatprep.subr.bf16.mxu0 0
        %486 = vmatpush1.bf16.xpose.msra.mxu0 0
        %487 = vmatprep.subr.bf16.mxu0 0
        %488 = vmatpush1.bf16.xpose.msra.mxu0 0
        %489 = vmatprep.subr.bf16.mxu0 0
        %490 = vmatpush1.bf16.xpose.msra.mxu0 0
        %491 = vmatprep.subr.bf16.mxu0 0
        %492 = vmatpush1.bf16.xpose.msra.mxu0 0
        %493 = vmatprep.subr.bf16.mxu0 0
        %494 = vmatpush1.bf16.xpose.msra.mxu0 0
        %495 = vmatprep.subr.bf16.mxu0 0
        %496 = vmatpush1.bf16.xpose.msra.mxu0 0
        %497 = vmatprep.mubr.bf16.mxu0 0
        %498 = vmatmul.mubr.bf16.gmra.mrb[0].mxu0 %v460
        %v499 = vpop.f32.mrb[0].mxu0
        %v500 = vadd.f32 0.0, %v499
        %v501 = vpop.f32.mrb[0].mxu0
        %v502 = vpop.f32.mrb[0].mxu0
        %v503 = vpop.f32.mrb[0].mxu0
        %504 = vdwg.mxu0
        %v505 = vsel %vm393, %v500, -inf
        %506 = vmax.xlane.f32.xlu0 %v505
        %v507 = vpop.xlane.xlu0 %506
        %v508 = vsub.f32 %v500, %v507
        %v509 = vmul.f32 %v508, 1.442695
        %v510 = vpow.pop %v509
        %v511 = vsel %vm393, %v510, 0.0
        %512 = vadd.xlane.f32.xlu0 %v511
        %v513 = vpop.xlane.xlu0 %512
        %v514 = vrcp.pop %v513
        %v515 = vmul.f32 %v510, %v514
        %v516 = vpack.c.bf16 %v515, %v515
        %517 = vrot.lane.b32.xlu0 %v342, 60
        %v518 = vpop.permute.xlu0 %517
        %v520 = vsel %vm393, %v516, 0
        %v523 = vsel %vm411, %v518, 0
        %525 = vmatprep.subr.bf16.mxu0 0
        %526 = vmatpush1.bf16.msra.mxu0 %v523
        %527 = vmatprep.subr.bf16.mxu0 0
        %528 = vmatpush1.bf16.msra.mxu0 0
        %529 = vmatprep.subr.bf16.mxu0 0
        %530 = vmatpush1.bf16.msra.mxu0 0
        %531 = vmatprep.subr.bf16.mxu0 0
        %532 = vmatpush1.bf16.msra.mxu0 0
        %533 = vmatprep.subr.bf16.mxu0 0
        %534 = vmatpush1.bf16.msra.mxu0 0
        %535 = vmatprep.subr.bf16.mxu0 0
        %536 = vmatpush1.bf16.msra.mxu0 0
        %537 = vmatprep.subr.bf16.mxu0 0
        %538 = vmatpush1.bf16.msra.mxu0 0
        %539 = vmatprep.subr.bf16.mxu0 0
        %540 = vmatpush1.bf16.msra.mxu0 0
        %541 = vmatprep.subr.bf16.mxu0 0
        %542 = vmatpush1.bf16.msra.mxu0 0
        %543 = vmatprep.subr.bf16.mxu0 0
        %544 = vmatpush1.bf16.msra.mxu0 0
        %545 = vmatprep.subr.bf16.mxu0 0
        %546 = vmatpush1.bf16.msra.mxu0 0
        %547 = vmatprep.subr.bf16.mxu0 0
        %548 = vmatpush1.bf16.msra.mxu0 0
        %549 = vmatprep.subr.bf16.mxu0 0
        %550 = vmatpush1.bf16.msra.mxu0 0
        %551 = vmatprep.subr.bf16.mxu0 0
        %552 = vmatpush1.bf16.msra.mxu0 0
        %553 = vmatprep.subr.bf16.mxu0 0
        %554 = vmatpush1.bf16.msra.mxu0 0
        %555 = vmatprep.subr.bf16.mxu0 0
        %556 = vmatpush1.bf16.msra.mxu0 0
        %557 = vmatprep.mubr.bf16.mxu0 0
        %558 = vmatmul.mubr.bf16.gmra.mrb[0].mxu0 %v520
        %v559 = vpop.f32.mrb[0].mxu0
        %v560 = vadd.f32 0.0, %v559
        %v561 = vpop.f32.mrb[0].mxu0
        %v562 = vpop.f32.mrb[0].mxu0
        %v563 = vpop.f32.mrb[0].mxu0
        %564 = vdwg.mxu0
        %565 = vrot.lane.b32.xlu0 %v342, 120
        %v566 = vpop.permute.xlu0 %565
        %567 = vrot.lane.b32.xlu0 %v342, 88
        %v568 = vpop.permute.xlu0 %567
        %v570 = vsel %vm346, %v566, 0
        %v573 = vsel %vm346, %v568, 0
        %575 = vmatprep.subr.bf16.mxu0 0
        %576 = vmatpush1.bf16.xpose.msra.mxu0 %v573
        %577 = vmatprep.subr.bf16.mxu0 0
        %578 = vmatpush1.bf16.xpose.msra.mxu0 0
        %579 = vmatprep.subr.bf16.mxu0 0
        %580 = vmatpush1.bf16.xpose.msra.mxu0 0
        %581 = vmatprep.subr.bf16.mxu0 0
        %582 = vmatpush1.bf16.xpose.msra.mxu0 0
        %583 = vmatprep.subr.bf16.mxu0 0
        %584 = vmatpush1.bf16.xpose.msra.mxu0 0
        %585 = vmatprep.subr.bf16.mxu0 0
        %586 = vmatpush1.bf16.xpose.msra.mxu0 0
        %587 = vmatprep.subr.bf16.mxu0 0
        %588 = vmatpush1.bf16.xpose.msra.mxu0 0
        %589 = vmatprep.subr.bf16.mxu0 0
        %590 = vmatpush1.bf16.xpose.msra.mxu0 0
        %591 = vmatprep.subr.bf16.mxu0 0
        %592 = vmatpush1.bf16.xpose.msra.mxu0 0
        %593 = vmatprep.subr.bf16.mxu0 0
        %594 = vmatpush1.bf16.xpose.msra.mxu0 0
        %595 = vmatprep.subr.bf16.mxu0 0
        %596 = vmatpush1.bf16.xpose.msra.mxu0 0
        %597 = vmatprep.subr.bf16.mxu0 0
        %598 = vmatpush1.bf16.xpose.msra.mxu0 0
        %599 = vmatprep.subr.bf16.mxu0 0
        %600 = vmatpush1.bf16.xpose.msra.mxu0 0
        %601 = vmatprep.subr.bf16.mxu0 0
        %602 = vmatpush1.bf16.xpose.msra.mxu0 0
        %603 = vmatprep.subr.bf16.mxu0 0
        %604 = vmatpush1.bf16.xpose.msra.mxu0 0
        %605 = vmatprep.subr.bf16.mxu0 0
        %606 = vmatpush1.bf16.xpose.msra.mxu0 0
        %607 = vmatprep.mubr.bf16.mxu0 0
        %608 = vmatmul.mubr.bf16.gmra.mrb[0].mxu0 %v570
        %v609 = vpop.f32.mrb[0].mxu0
        %v610 = vadd.f32 0.0, %v609
        %v611 = vpop.f32.mrb[0].mxu0
        %v612 = vpop.f32.mrb[0].mxu0
        %v613 = vpop.f32.mrb[0].mxu0
        %614 = vdwg.mxu0
        %v615 = vsel %vm393, %v610, -inf
        %616 = vmax.xlane.f32.xlu0 %v615
        %v617 = vpop.xlane.xlu0 %616
        %v618 = vsub.f32 %v610, %v617
        %v619 = vmul.f32 %v618, 1.442695
        %v620 = vpow.pop %v619
        %v621 = vsel %vm393, %v620, 0.0
        %622 = vadd.xlane.f32.xlu0 %v621
        %v623 = vpop.xlane.xlu0 %622
        %v624 = vrcp.pop %v623
        %v625 = vmul.f32 %v620, %v624
        %v626 = vpack.c.bf16 %v625, %v625
        %627 = vrot.lane.b32.xlu0 %v342, 56
        %v628 = vpop.permute.xlu0 %627
        %v630 = vsel %vm393, %v626, 0
        %v633 = vsel %vm411, %v628, 0
        %635 = vmatprep.subr.bf16.mxu0 0
        %636 = vmatpush1.bf16.msra.mxu0 %v633
        %637 = vmatprep.subr.bf16.mxu0 0
        %638 = vmatpush1.bf16.msra.mxu0 0
        %639 = vmatprep.subr.bf16.mxu0 0
        %640 = vmatpush1.bf16.msra.mxu0 0
        %641 = vmatprep.subr.bf16.mxu0 0
        %642 = vmatpush1.bf16.msra.mxu0 0
        %643 = vmatprep.subr.bf16.mxu0 0
        %644 = vmatpush1.bf16.msra.mxu0 0
        %645 = vmatprep.subr.bf16.mxu0 0
        %646 = vmatpush1.bf16.msra.mxu0 0
        %647 = vmatprep.subr.bf16.mxu0 0
        %648 = vmatpush1.bf16.msra.mxu0 0
        %649 = vmatprep.subr.bf16.mxu0 0
        %650 = vmatpush1.bf16.msra.mxu0 0
        %651 = vmatprep.subr.bf16.mxu0 0
        %652 = vmatpush1.bf16.msra.mxu0 0
        %653 = vmatprep.subr.bf16.mxu0 0
        %654 = vmatpush1.bf16.msra.mxu0 0
        %655 = vmatprep.subr.bf16.mxu0 0
        %656 = vmatpush1.bf16.msra.mxu0 0
        %657 = vmatprep.subr.bf16.mxu0 0
        %658 = vmatpush1.bf16.msra.mxu0 0
        %659 = vmatprep.subr.bf16.mxu0 0
        %660 = vmatpush1.bf16.msra.mxu0 0
        %661 = vmatprep.subr.bf16.mxu0 0
        %662 = vmatpush1.bf16.msra.mxu0 0
        %663 = vmatprep.subr.bf16.mxu0 0
        %664 = vmatpush1.bf16.msra.mxu0 0
        %665 = vmatprep.subr.bf16.mxu0 0
        %666 = vmatpush1.bf16.msra.mxu0 0
        %667 = vmatprep.mubr.bf16.mxu0 0
        %668 = vmatmul.mubr.bf16.gmra.mrb[0].mxu0 %v630
        %v669 = vpop.f32.mrb[0].mxu0
        %v670 = vadd.f32 0.0, %v669
        %v671 = vpop.f32.mrb[0].mxu0
        %v672 = vpop.f32.mrb[0].mxu0
        %v673 = vpop.f32.mrb[0].mxu0
        %674 = vdwg.mxu0
        %675 = vrot.lane.b32.xlu0 %v342, 116
        %v676 = vpop.permute.xlu0 %675
        %677 = vrot.lane.b32.xlu0 %v342, 84
        %v678 = vpop.permute.xlu0 %677
        %v680 = vsel %vm346, %v676, 0
        %v683 = vsel %vm346, %v678, 0
        %685 = vmatprep.subr.bf16.mxu0 0
        %686 = vmatpush1.bf16.xpose.msra.mxu0 %v683
        %687 = vmatprep.subr.bf16.mxu0 0
        %688 = vmatpush1.bf16.xpose.msra.mxu0 0
        %689 = vmatprep.subr.bf16.mxu0 0
        %690 = vmatpush1.bf16.xpose.msra.mxu0 0
        %691 = vmatprep.subr.bf16.mxu0 0
        %692 = vmatpush1.bf16.xpose.msra.mxu0 0
        %693 = vmatprep.subr.bf16.mxu0 0
        %694 = vmatpush1.bf16.xpose.msra.mxu0 0
        %695 = vmatprep.subr.bf16.mxu0 0
        %696 = vmatpush1.bf16.xpose.msra.mxu0 0
        %697 = vmatprep.subr.bf16.mxu0 0
        %698 = vmatpush1.bf16.xpose.msra.mxu0 0
        %699 = vmatprep.subr.bf16.mxu0 0
        %700 = vmatpush1.bf16.xpose.msra.mxu0 0
        %701 = vmatprep.subr.bf16.mxu0 0
        %702 = vmatpush1.bf16.xpose.msra.mxu0 0
        %703 = vmatprep.subr.bf16.mxu0 0
        %704 = vmatpush1.bf16.xpose.msra.mxu0 0
        %705 = vmatprep.subr.bf16.mxu0 0
        %706 = vmatpush1.bf16.xpose.msra.mxu0 0
        %707 = vmatprep.subr.bf16.mxu0 0
        %708 = vmatpush1.bf16.xpose.msra.mxu0 0
        %709 = vmatprep.subr.bf16.mxu0 0
        %710 = vmatpush1.bf16.xpose.msra.mxu0 0
        %711 = vmatprep.subr.bf16.mxu0 0
        %712 = vmatpush1.bf16.xpose.msra.mxu0 0
        %713 = vmatprep.subr.bf16.mxu0 0
        %714 = vmatpush1.bf16.xpose.msra.mxu0 0
        %715 = vmatprep.subr.bf16.mxu0 0
        %716 = vmatpush1.bf16.xpose.msra.mxu0 0
        %717 = vmatprep.mubr.bf16.mxu0 0
        %718 = vmatmul.mubr.bf16.gmra.mrb[0].mxu0 %v680
        %v719 = vpop.f32.mrb[0].mxu0
        %v720 = vadd.f32 0.0, %v719
        %v721 = vpop.f32.mrb[0].mxu0
        %v722 = vpop.f32.mrb[0].mxu0
        %v723 = vpop.f32.mrb[0].mxu0
        %724 = vdwg.mxu0
        %v725 = vsel %vm393, %v720, -inf
        %726 = vmax.xlane.f32.xlu0 %v725
        %v727 = vpop.xlane.xlu0 %726
        %v728 = vsub.f32 %v720, %v727
        %v729 = vmul.f32 %v728, 1.442695
        %v730 = vpow.pop %v729
        %v731 = vsel %vm393, %v730, 0.0
        %732 = vadd.xlane.f32.xlu0 %v731
        %v733 = vpop.xlane.xlu0 %732
        %v734 = vrcp.pop %v733
        %v735 = vmul.f32 %v730, %v734
        %v736 = vpack.c.bf16 %v735, %v735
        %737 = vrot.lane.b32.xlu0 %v342, 52
        %v738 = vpop.permute.xlu0 %737
        %v740 = vsel %vm393, %v736, 0
        %v743 = vsel %vm411, %v738, 0
        %745 = vmatprep.subr.bf16.mxu0 0
        %746 = vmatpush1.bf16.msra.mxu0 %v743
        %747 = vmatprep.subr.bf16.mxu0 0
        %748 = vmatpush1.bf16.msra.mxu0 0
        %749 = vmatprep.subr.bf16.mxu0 0
        %750 = vmatpush1.bf16.msra.mxu0 0
        %751 = vmatprep.subr.bf16.mxu0 0
        %752 = vmatpush1.bf16.msra.mxu0 0
        %753 = vmatprep.subr.bf16.mxu0 0
        %754 = vmatpush1.bf16.msra.mxu0 0
        %755 = vmatprep.subr.bf16.mxu0 0
        %756 = vmatpush1.bf16.msra.mxu0 0
        %757 = vmatprep.subr.bf16.mxu0 0
        %758 = vmatpush1.bf16.msra.mxu0 0
        %759 = vmatprep.subr.bf16.mxu0 0
        %760 = vmatpush1.bf16.msra.mxu0 0
        %761 = vmatprep.subr.bf16.mxu0 0
        %762 = vmatpush1.bf16.msra.mxu0 0
        %763 = vmatprep.subr.bf16.mxu0 0
        %764 = vmatpush1.bf16.msra.mxu0 0
        %765 = vmatprep.subr.bf16.mxu0 0
        %766 = vmatpush1.bf16.msra.mxu0 0
        %767 = vmatprep.subr.bf16.mxu0 0
        %768 = vmatpush1.bf16.msra.mxu0 0
        %769 = vmatprep.subr.bf16.mxu0 0
        %770 = vmatpush1.bf16.msra.mxu0 0
        %771 = vmatprep.subr.bf16.mxu0 0
        %772 = vmatpush1.bf16.msra.mxu0 0
        %773 = vmatprep.subr.bf16.mxu0 0
        %774 = vmatpush1.bf16.msra.mxu0 0
        %775 = vmatprep.subr.bf16.mxu0 0
        %776 = vmatpush1.bf16.msra.mxu0 0
        %777 = vmatprep.mubr.bf16.mxu0 0
        %778 = vmatmul.mubr.bf16.gmra.mrb[0].mxu0 %v740
        %v779 = vpop.f32.mrb[0].mxu0
        %v780 = vadd.f32 0.0, %v779
        %v781 = vpop.f32.mrb[0].mxu0
        %v782 = vpop.f32.mrb[0].mxu0
        %v783 = vpop.f32.mrb[0].mxu0
        %784 = vdwg.mxu0
        %785 = vrot.lane.b32.xlu0 %v342, 112
        %v786 = vpop.permute.xlu0 %785
        %787 = vrot.lane.b32.xlu0 %v342, 80
        %v788 = vpop.permute.xlu0 %787
        %v790 = vsel %vm346, %v786, 0
        %v793 = vsel %vm346, %v788, 0
        %795 = vmatprep.subr.bf16.mxu0 0
        %796 = vmatpush1.bf16.xpose.msra.mxu0 %v793
        %797 = vmatprep.subr.bf16.mxu0 0
        %798 = vmatpush1.bf16.xpose.msra.mxu0 0
        %799 = vmatprep.subr.bf16.mxu0 0
        %800 = vmatpush1.bf16.xpose.msra.mxu0 0
        %801 = vmatprep.subr.bf16.mxu0 0
        %802 = vmatpush1.bf16.xpose.msra.mxu0 0
        %803 = vmatprep.subr.bf16.mxu0 0
        %804 = vmatpush1.bf16.xpose.msra.mxu0 0
        %805 = vmatprep.subr.bf16.mxu0 0
        %806 = vmatpush1.bf16.xpose.msra.mxu0 0
        %807 = vmatprep.subr.bf16.mxu0 0
        %808 = vmatpush1.bf16.xpose.msra.mxu0 0
        %809 = vmatprep.subr.bf16.mxu0 0
        %810 = vmatpush1.bf16.xpose.msra.mxu0 0
        %811 = vmatprep.subr.bf16.mxu0 0
        %812 = vmatpush1.bf16.xpose.msra.mxu0 0
        %813 = vmatprep.subr.bf16.mxu0 0
        %814 = vmatpush1.bf16.xpose.msra.mxu0 0
        %815 = vmatprep.subr.bf16.mxu0 0
        %816 = vmatpush1.bf16.xpose.msra.mxu0 0
        %817 = vmatprep.subr.bf16.mxu0 0
        %818 = vmatpush1.bf16.xpose.msra.mxu0 0
        %819 = vmatprep.subr.bf16.mxu0 0
        %820 = vmatpush1.bf16.xpose.msra.mxu0 0
        %821 = vmatprep.subr.bf16.mxu0 0
        %822 = vmatpush1.bf16.xpose.msra.mxu0 0
        %823 = vmatprep.subr.bf16.mxu0 0
        %824 = vmatpush1.bf16.xpose.msra.mxu0 0
        %825 = vmatprep.subr.bf16.mxu0 0
        %826 = vmatpush1.bf16.xpose.msra.mxu0 0
        %827 = vmatprep.mubr.bf16.mxu0 0
        %828 = vmatmul.mubr.bf16.gmra.mrb[0].mxu0 %v790
        %v829 = vpop.f32.mrb[0].mxu0
        %v830 = vadd.f32 0.0, %v829
        %v831 = vpop.f32.mrb[0].mxu0
        %v832 = vpop.f32.mrb[0].mxu0
        %v833 = vpop.f32.mrb[0].mxu0
        %834 = vdwg.mxu0
        %v835 = vsel %vm393, %v830, -inf
        %836 = vmax.xlane.f32.xlu0 %v835
        %v837 = vpop.xlane.xlu0 %836
        %v838 = vsub.f32 %v830, %v837
        %v839 = vmul.f32 %v838, 1.442695
        %v840 = vpow.pop %v839
        %v841 = vsel %vm393, %v840, 0.0
        %842 = vadd.xlane.f32.xlu0 %v841
        %v843 = vpop.xlane.xlu0 %842
        %v844 = vrcp.pop %v843
        %v845 = vmul.f32 %v840, %v844
        %v846 = vpack.c.bf16 %v845, %v845
        %847 = vrot.lane.b32.xlu0 %v342, 48
        %v848 = vpop.permute.xlu0 %847
        %v850 = vsel %vm393, %v846, 0
        %v853 = vsel %vm411, %v848, 0
        %855 = vmatprep.subr.bf16.mxu0 0
        %856 = vmatpush1.bf16.msra.mxu0 %v853
        %857 = vmatprep.subr.bf16.mxu0 0
        %858 = vmatpush1.bf16.msra.mxu0 0
        %859 = vmatprep.subr.bf16.mxu0 0
        %860 = vmatpush1.bf16.msra.mxu0 0
        %861 = vmatprep.subr.bf16.mxu0 0
        %862 = vmatpush1.bf16.msra.mxu0 0
        %863 = vmatprep.subr.bf16.mxu0 0
        %864 = vmatpush1.bf16.msra.mxu0 0
        %865 = vmatprep.subr.bf16.mxu0 0
        %866 = vmatpush1.bf16.msra.mxu0 0
        %867 = vmatprep.subr.bf16.mxu0 0
        %868 = vmatpush1.bf16.msra.mxu0 0
        %869 = vmatprep.subr.bf16.mxu0 0
        %870 = vmatpush1.bf16.msra.mxu0 0
        %871 = vmatprep.subr.bf16.mxu0 0
        %872 = vmatpush1.bf16.msra.mxu0 0
        %873 = vmatprep.subr.bf16.mxu0 0
        %874 = vmatpush1.bf16.msra.mxu0 0
        %875 = vmatprep.subr.bf16.mxu0 0
        %876 = vmatpush1.bf16.msra.mxu0 0
        %877 = vmatprep.subr.bf16.mxu0 0
        %878 = vmatpush1.bf16.msra.mxu0 0
        %879 = vmatprep.subr.bf16.mxu0 0
        %880 = vmatpush1.bf16.msra.mxu0 0
        %881 = vmatprep.subr.bf16.mxu0 0
        %882 = vmatpush1.bf16.msra.mxu0 0
        %883 = vmatprep.subr.bf16.mxu0 0
        %884 = vmatpush1.bf16.msra.mxu0 0
        %885 = vmatprep.subr.bf16.mxu0 0
        %886 = vmatpush1.bf16.msra.mxu0 0
        %887 = vmatprep.mubr.bf16.mxu0 0
        %888 = vmatmul.mubr.bf16.gmra.mrb[0].mxu0 %v850
        %v889 = vpop.f32.mrb[0].mxu0
        %v890 = vadd.f32 0.0, %v889
        %v891 = vpop.f32.mrb[0].mxu0
        %v892 = vpop.f32.mrb[0].mxu0
        %v893 = vpop.f32.mrb[0].mxu0
        %894 = vdwg.mxu0
        %895 = vrot.lane.b32.xlu0 %v342, 108
        %v896 = vpop.permute.xlu0 %895
        %897 = vrot.lane.b32.xlu0 %v342, 76
        %v898 = vpop.permute.xlu0 %897
        %v900 = vsel %vm346, %v896, 0
        %v903 = vsel %vm346, %v898, 0
        %905 = vmatprep.subr.bf16.mxu0 0
        %906 = vmatpush1.bf16.xpose.msra.mxu0 %v903
        %907 = vmatprep.subr.bf16.mxu0 0
        %908 = vmatpush1.bf16.xpose.msra.mxu0 0
        %909 = vmatprep.subr.bf16.mxu0 0
        %910 = vmatpush1.bf16.xpose.msra.mxu0 0
        %911 = vmatprep.subr.bf16.mxu0 0
        %912 = vmatpush1.bf16.xpose.msra.mxu0 0
        %913 = vmatprep.subr.bf16.mxu0 0
        %914 = vmatpush1.bf16.xpose.msra.mxu0 0
        %915 = vmatprep.subr.bf16.mxu0 0
        %916 = vmatpush1.bf16.xpose.msra.mxu0 0
        %917 = vmatprep.subr.bf16.mxu0 0
        %918 = vmatpush1.bf16.xpose.msra.mxu0 0
        %919 = vmatprep.subr.bf16.mxu0 0
        %920 = vmatpush1.bf16.xpose.msra.mxu0 0
        %921 = vmatprep.subr.bf16.mxu0 0
        %922 = vmatpush1.bf16.xpose.msra.mxu0 0
        %923 = vmatprep.subr.bf16.mxu0 0
        %924 = vmatpush1.bf16.xpose.msra.mxu0 0
        %925 = vmatprep.subr.bf16.mxu0 0
        %926 = vmatpush1.bf16.xpose.msra.mxu0 0
        %927 = vmatprep.subr.bf16.mxu0 0
        %928 = vmatpush1.bf16.xpose.msra.mxu0 0
        %929 = vmatprep.subr.bf16.mxu0 0
        %930 = vmatpush1.bf16.xpose.msra.mxu0 0
        %931 = vmatprep.subr.bf16.mxu0 0
        %932 = vmatpush1.bf16.xpose.msra.mxu0 0
        %933 = vmatprep.subr.bf16.mxu0 0
        %934 = vmatpush1.bf16.xpose.msra.mxu0 0
        %935 = vmatprep.subr.bf16.mxu0 0
        %936 = vmatpush1.bf16.xpose.msra.mxu0 0
        %937 = vmatprep.mubr.bf16.mxu0 0
        %938 = vmatmul.mubr.bf16.gmra.mrb[0].mxu0 %v900
        %v939 = vpop.f32.mrb[0].mxu0
        %v940 = vadd.f32 0.0, %v939
        %v941 = vpop.f32.mrb[0].mxu0
        %v942 = vpop.f32.mrb[0].mxu0
        %v943 = vpop.f32.mrb[0].mxu0
        %944 = vdwg.mxu0
        %v945 = vsel %vm393, %v940, -inf
        %946 = vmax.xlane.f32.xlu0 %v945
        %v947 = vpop.xlane.xlu0 %946
        %v948 = vsub.f32 %v940, %v947
        %v949 = vmul.f32 %v948, 1.442695
        %v950 = vpow.pop %v949
        %v951 = vsel %vm393, %v950, 0.0
        %952 = vadd.xlane.f32.xlu0 %v951
        %v953 = vpop.xlane.xlu0 %952
        %v954 = vrcp.pop %v953
        %v955 = vmul.f32 %v950, %v954
        %v956 = vpack.c.bf16 %v955, %v955
        %957 = vrot.lane.b32.xlu0 %v342, 44
        %v958 = vpop.permute.xlu0 %957
        %v960 = vsel %vm393, %v956, 0
        %v963 = vsel %vm411, %v958, 0
        %965 = vmatprep.subr.bf16.mxu0 0
        %966 = vmatpush1.bf16.msra.mxu0 %v963
        %967 = vmatprep.subr.bf16.mxu0 0
        %968 = vmatpush1.bf16.msra.mxu0 0
        %969 = vmatprep.subr.bf16.mxu0 0
        %970 = vmatpush1.bf16.msra.mxu0 0
        %971 = vmatprep.subr.bf16.mxu0 0
        %972 = vmatpush1.bf16.msra.mxu0 0
        %973 = vmatprep.subr.bf16.mxu0 0
        %974 = vmatpush1.bf16.msra.mxu0 0
        %975 = vmatprep.subr.bf16.mxu0 0
        %976 = vmatpush1.bf16.msra.mxu0 0
        %977 = vmatprep.subr.bf16.mxu0 0
        %978 = vmatpush1.bf16.msra.mxu0 0
        %979 = vmatprep.subr.bf16.mxu0 0
        %980 = vmatpush1.bf16.msra.mxu0 0
        %981 = vmatprep.subr.bf16.mxu0 0
        %982 = vmatpush1.bf16.msra.mxu0 0
        %983 = vmatprep.subr.bf16.mxu0 0
        %984 = vmatpush1.bf16.msra.mxu0 0
        %985 = vmatprep.subr.bf16.mxu0 0
        %986 = vmatpush1.bf16.msra.mxu0 0
        %987 = vmatprep.subr.bf16.mxu0 0
        %988 = vmatpush1.bf16.msra.mxu0 0
        %989 = vmatprep.subr.bf16.mxu0 0
        %990 = vmatpush1.bf16.msra.mxu0 0
        %991 = vmatprep.subr.bf16.mxu0 0
        %992 = vmatpush1.bf16.msra.mxu0 0
        %993 = vmatprep.subr.bf16.mxu0 0
        %994 = vmatpush1.bf16.msra.mxu0 0
        %995 = vmatprep.subr.bf16.mxu0 0
        %996 = vmatpush1.bf16.msra.mxu0 0
        %997 = vmatprep.mubr.bf16.mxu0 0
        %998 = vmatmul.mubr.bf16.gmra.mrb[0].mxu0 %v960
        %v999 = vpop.f32.mrb[0].mxu0
        %v1000 = vadd.f32 0.0, %v999
        %v1001 = vpop.f32.mrb[0].mxu0
        %v1002 = vpop.f32.mrb[0].mxu0
        %v1003 = vpop.f32.mrb[0].mxu0
        %1004 = vdwg.mxu0
        %1005 = vrot.lane.b32.xlu0 %v342, 104
        %v1006 = vpop.permute.xlu0 %1005
        %1007 = vrot.lane.b32.xlu0 %v342, 72
        %v1008 = vpop.permute.xlu0 %1007
        %v1010 = vsel %vm346, %v1006, 0
        %v1013 = vsel %vm346, %v1008, 0
        %1015 = vmatprep.subr.bf16.mxu0 0
        %1016 = vmatpush1.bf16.xpose.msra.mxu0 %v1013
        %1017 = vmatprep.subr.bf16.mxu0 0
        %1018 = vmatpush1.bf16.xpose.msra.mxu0 0
        %1019 = vmatprep.subr.bf16.mxu0 0
        %1020 = vmatpush1.bf16.xpose.msra.mxu0 0
        %1021 = vmatprep.subr.bf16.mxu0 0
        %1022 = vmatpush1.bf16.xpose.msra.mxu0 0
        %1023 = vmatprep.subr.bf16.mxu0 0
        %1024 = vmatpush1.bf16.xpose.msra.mxu0 0
        %1025 = vmatprep.subr.bf16.mxu0 0
        %1026 = vmatpush1.bf16.xpose.msra.mxu0 0
        %1027 = vmatprep.subr.bf16.mxu0 0
        %1028 = vmatpush1.bf16.xpose.msra.mxu0 0
        %1029 = vmatprep.subr.bf16.mxu0 0
        %1030 = vmatpush1.bf16.xpose.msra.mxu0 0
        %1031 = vmatprep.subr.bf16.mxu0 0
        %1032 = vmatpush1.bf16.xpose.msra.mxu0 0
        %1033 = vmatprep.subr.bf16.mxu0 0
        %1034 = vmatpush1.bf16.xpose.msra.mxu0 0
        %1035 = vmatprep.subr.bf16.mxu0 0
        %1036 = vmatpush1.bf16.xpose.msra.mxu0 0
        %1037 = vmatprep.subr.bf16.mxu0 0
        %1038 = vmatpush1.bf16.xpose.msra.mxu0 0
        %1039 = vmatprep.subr.bf16.mxu0 0
        %1040 = vmatpush1.bf16.xpose.msra.mxu0 0
        %1041 = vmatprep.subr.bf16.mxu0 0
        %1042 = vmatpush1.bf16.xpose.msra.mxu0 0
        %1043 = vmatprep.subr.bf16.mxu0 0
        %1044 = vmatpush1.bf16.xpose.msra.mxu0 0
        %1045 = vmatprep.subr.bf16.mxu0 0
        %1046 = vmatpush1.bf16.xpose.msra.mxu0 0
        %1047 = vmatprep.mubr.bf16.mxu0 0
        %1048 = vmatmul.mubr.bf16.gmra.mrb[0].mxu0 %v1010
        %v1049 = vpop.f32.mrb[0].mxu0
        %v1050 = vadd.f32 0.0, %v1049
        %v1051 = vpop.f32.mrb[0].mxu0
        %v1052 = vpop.f32.mrb[0].mxu0
        %v1053 = vpop.f32.mrb[0].mxu0
        %1054 = vdwg.mxu0
        %v1055 = vsel %vm393, %v1050, -inf
        %1056 = vmax.xlane.f32.xlu0 %v1055
        %v1057 = vpop.xlane.xlu0 %1056
        %v1058 = vsub.f32 %v1050, %v1057
        %v1059 = vmul.f32 %v1058, 1.442695
        %v1060 = vpow.pop %v1059
        %v1061 = vsel %vm393, %v1060, 0.0
        %1062 = vadd.xlane.f32.xlu0 %v1061
        %v1063 = vpop.xlane.xlu0 %1062
        %v1064 = vrcp.pop %v1063
        %v1065 = vmul.f32 %v1060, %v1064
        %v1066 = vpack.c.bf16 %v1065, %v1065
        %1067 = vrot.lane.b32.xlu0 %v342, 40
        %v1068 = vpop.permute.xlu0 %1067
        %v1070 = vsel %vm393, %v1066, 0
        %v1073 = vsel %vm411, %v1068, 0
        %1075 = vmatprep.subr.bf16.mxu0 0
        %1076 = vmatpush1.bf16.msra.mxu0 %v1073
        %1077 = vmatprep.subr.bf16.mxu0 0
        %1078 = vmatpush1.bf16.msra.mxu0 0
        %1079 = vmatprep.subr.bf16.mxu0 0
        %1080 = vmatpush1.bf16.msra.mxu0 0
        %1081 = vmatprep.subr.bf16.mxu0 0
        %1082 = vmatpush1.bf16.msra.mxu0 0
        %1083 = vmatprep.subr.bf16.mxu0 0
        %1084 = vmatpush1.bf16.msra.mxu0 0
        %1085 = vmatprep.subr.bf16.mxu0 0
        %1086 = vmatpush1.bf16.msra.mxu0 0
        %1087 = vmatprep.subr.bf16.mxu0 0
        %1088 = vmatpush1.bf16.msra.mxu0 0
        %1089 = vmatprep.subr.bf16.mxu0 0
        %1090 = vmatpush1.bf16.msra.mxu0 0
        %1091 = vmatprep.subr.bf16.mxu0 0
        %1092 = vmatpush1.bf16.msra.mxu0 0
        %1093 = vmatprep.subr.bf16.mxu0 0
        %1094 = vmatpush1.bf16.msra.mxu0 0
        %1095 = vmatprep.subr.bf16.mxu0 0
        %1096 = vmatpush1.bf16.msra.mxu0 0
        %1097 = vmatprep.subr.bf16.mxu0 0
        %1098 = vmatpush1.bf16.msra.mxu0 0
        %1099 = vmatprep.subr.bf16.mxu0 0
        %1100 = vmatpush1.bf16.msra.mxu0 0
        %1101 = vmatprep.subr.bf16.mxu0 0
        %1102 = vmatpush1.bf16.msra.mxu0 0
        %1103 = vmatprep.subr.bf16.mxu0 0
        %1104 = vmatpush1.bf16.msra.mxu0 0
        %1105 = vmatprep.subr.bf16.mxu0 0
        %1106 = vmatpush1.bf16.msra.mxu0 0
        %1107 = vmatprep.mubr.bf16.mxu0 0
        %1108 = vmatmul.mubr.bf16.gmra.mrb[0].mxu0 %v1070
        %v1109 = vpop.f32.mrb[0].mxu0
        %v1110 = vadd.f32 0.0, %v1109
        %v1111 = vpop.f32.mrb[0].mxu0
        %v1112 = vpop.f32.mrb[0].mxu0
        %v1113 = vpop.f32.mrb[0].mxu0
        %1114 = vdwg.mxu0
        %1115 = vrot.lane.b32.xlu0 %v342, 100
        %v1116 = vpop.permute.xlu0 %1115
        %1117 = vrot.lane.b32.xlu0 %v342, 68
        %v1118 = vpop.permute.xlu0 %1117
        %v1120 = vsel %vm346, %v1116, 0
        %v1123 = vsel %vm346, %v1118, 0
        %1125 = vmatprep.subr.bf16.mxu0 0
        %1126 = vmatpush1.bf16.xpose.msra.mxu0 %v1123
        %1127 = vmatprep.subr.bf16.mxu0 0
        %1128 = vmatpush1.bf16.xpose.msra.mxu0 0
        %1129 = vmatprep.subr.bf16.mxu0 0
        %1130 = vmatpush1.bf16.xpose.msra.mxu0 0
        %1131 = vmatprep.subr.bf16.mxu0 0
        %1132 = vmatpush1.bf16.xpose.msra.mxu0 0
        %1133 = vmatprep.subr.bf16.mxu0 0
        %1134 = vmatpush1.bf16.xpose.msra.mxu0 0
        %1135 = vmatprep.subr.bf16.mxu0 0
        %1136 = vmatpush1.bf16.xpose.msra.mxu0 0
        %1137 = vmatprep.subr.bf16.mxu0 0
        %1138 = vmatpush1.bf16.xpose.msra.mxu0 0
        %1139 = vmatprep.subr.bf16.mxu0 0
        %1140 = vmatpush1.bf16.xpose.msra.mxu0 0
        %1141 = vmatprep.subr.bf16.mxu0 0
        %1142 = vmatpush1.bf16.xpose.msra.mxu0 0
        %1143 = vmatprep.subr.bf16.mxu0 0
        %1144 = vmatpush1.bf16.xpose.msra.mxu0 0
        %1145 = vmatprep.subr.bf16.mxu0 0
        %1146 = vmatpush1.bf16.xpose.msra.mxu0 0
        %1147 = vmatprep.subr.bf16.mxu0 0
        %1148 = vmatpush1.bf16.xpose.msra.mxu0 0
        %1149 = vmatprep.subr.bf16.mxu0 0
        %1150 = vmatpush1.bf16.xpose.msra.mxu0 0
        %1151 = vmatprep.subr.bf16.mxu0 0
        %1152 = vmatpush1.bf16.xpose.msra.mxu0 0
        %1153 = vmatprep.subr.bf16.mxu0 0
        %1154 = vmatpush1.bf16.xpose.msra.mxu0 0
        %1155 = vmatprep.subr.bf16.mxu0 0
        %1156 = vmatpush1.bf16.xpose.msra.mxu0 0
        %1157 = vmatprep.mubr.bf16.mxu0 0
        %1158 = vmatmul.mubr.bf16.gmra.mrb[0].mxu0 %v1120
        %v1159 = vpop.f32.mrb[0].mxu0
        %v1160 = vadd.f32 0.0, %v1159
        %v1161 = vpop.f32.mrb[0].mxu0
        %v1162 = vpop.f32.mrb[0].mxu0
        %v1163 = vpop.f32.mrb[0].mxu0
        %1164 = vdwg.mxu0
        %v1165 = vsel %vm393, %v1160, -inf
        %1166 = vmax.xlane.f32.xlu0 %v1165
        %v1167 = vpop.xlane.xlu0 %1166
        %v1168 = vsub.f32 %v1160, %v1167
        %v1169 = vmul.f32 %v1168, 1.442695
        %v1170 = vpow.pop %v1169
        %v1171 = vsel %vm393, %v1170, 0.0
        %1172 = vadd.xlane.f32.xlu0 %v1171
        %v1173 = vpop.xlane.xlu0 %1172
        %v1174 = vrcp.pop %v1173
        %v1175 = vmul.f32 %v1170, %v1174
        %v1176 = vpack.c.bf16 %v1175, %v1175
        %1177 = vrot.lane.b32.xlu0 %v342, 36
        %v1178 = vpop.permute.xlu0 %1177
        %v1180 = vsel %vm393, %v1176, 0
        %v1183 = vsel %vm411, %v1178, 0
        %1185 = vmatprep.subr.bf16.mxu0 0
        %1186 = vmatpush1.bf16.msra.mxu0 %v1183
        %1187 = vmatprep.subr.bf16.mxu0 0
        %1188 = vmatpush1.bf16.msra.mxu0 0
        %1189 = vmatprep.subr.bf16.mxu0 0
        %1190 = vmatpush1.bf16.msra.mxu0 0
        %1191 = vmatprep.subr.bf16.mxu0 0
        %1192 = vmatpush1.bf16.msra.mxu0 0
        %1193 = vmatprep.subr.bf16.mxu0 0
        %1194 = vmatpush1.bf16.msra.mxu0 0
        %1195 = vmatprep.subr.bf16.mxu0 0
        %1196 = vmatpush1.bf16.msra.mxu0 0
        %1197 = vmatprep.subr.bf16.mxu0 0
        %1198 = vmatpush1.bf16.msra.mxu0 0
        %1199 = vmatprep.subr.bf16.mxu0 0
        %1200 = vmatpush1.bf16.msra.mxu0 0
        %1201 = vmatprep.subr.bf16.mxu0 0
        %1202 = vmatpush1.bf16.msra.mxu0 0
        %1203 = vmatprep.subr.bf16.mxu0 0
        %1204 = vmatpush1.bf16.msra.mxu0 0
        %1205 = vmatprep.subr.bf16.mxu0 0
        %1206 = vmatpush1.bf16.msra.mxu0 0
        %1207 = vmatprep.subr.bf16.mxu0 0
        %1208 = vmatpush1.bf16.msra.mxu0 0
        %1209 = vmatprep.subr.bf16.mxu0 0
        %1210 = vmatpush1.bf16.msra.mxu0 0
        %1211 = vmatprep.subr.bf16.mxu0 0
        %1212 = vmatpush1.bf16.msra.mxu0 0
        %1213 = vmatprep.subr.bf16.mxu0 0
        %1214 = vmatpush1.bf16.msra.mxu0 0
        %1215 = vmatprep.subr.bf16.mxu0 0
        %1216 = vmatpush1.bf16.msra.mxu0 0
        %1217 = vmatprep.mubr.bf16.mxu0 0
        %1218 = vmatmul.mubr.bf16.gmra.mrb[0].mxu0 %v1180
        %v1219 = vpop.f32.mrb[0].mxu0
        %v1220 = vadd.f32 0.0, %v1219
        %v1221 = vpop.f32.mrb[0].mxu0
        %v1222 = vpop.f32.mrb[0].mxu0
        %v1223 = vpop.f32.mrb[0].mxu0
        %1224 = vdwg.mxu0
        %1226 = vrot.lane.b32.xlu0 %v515, 8
        %v1227 = vpop.permute.xlu0 %1226
        %1230 = vrot.lane.b32.xlu0 %v625, 16
        %v1231 = vpop.permute.xlu0 %1230
        %1234 = vrot.lane.b32.xlu0 %v735, 24
        %v1235 = vpop.permute.xlu0 %1234
        %1238 = vrot.lane.b32.xlu0 %v845, 32
        %v1239 = vpop.permute.xlu0 %1238
        %1242 = vrot.lane.b32.xlu0 %v955, 40
        %v1243 = vpop.permute.xlu0 %1242
        %1246 = vrot.lane.b32.xlu0 %v1065, 48
        %v1247 = vpop.permute.xlu0 %1246
        %1250 = vrot.lane.b32.xlu0 %v1175, 56
        %v1251 = vpop.permute.xlu0 %1250
        %v1253 = vsel %vm393, %v404, %v1227
        %vm1254 = vcmask 130048
        %v1255 = vsel %vm1254, %v1253, %v1231
        %vm1256 = vcmask 195584
        %v1257 = vsel %vm1256, %v1255, %v1235
        %v1258 = vsel %vm298, %v1257, %v1239
        %vm1259 = vcmask 326656
        %v1260 = vsel %vm1259, %v1258, %v1243
        %vm1261 = vcmask 392192
        %v1262 = vsel %vm1261, %v1260, %v1247
        %vm1263 = vcmask 457728
        %v1264 = vsel %vm1263, %v1262, %v1251
        %vm1265 = vcmask 523264
        %1266 = vst.msk [vmem:[%s279] sm:$0xff] %vm1265, %v1264
        %1268 = vrot.lane.b32.xlu0 %v560, 4
        %v1269 = vpop.permute.xlu0 %1268
        %1272 = vrot.lane.b32.xlu0 %v670, 8
        %v1273 = vpop.permute.xlu0 %1272
        %1276 = vrot.lane.b32.xlu0 %v780, 12
        %v1277 = vpop.permute.xlu0 %1276
        %1280 = vrot.lane.b32.xlu0 %v890, 16
        %v1281 = vpop.permute.xlu0 %1280
        %1284 = vrot.lane.b32.xlu0 %v1000, 20
        %v1285 = vpop.permute.xlu0 %1284
        %1288 = vrot.lane.b32.xlu0 %v1110, 24
        %v1289 = vpop.permute.xlu0 %1288
        %1292 = vrot.lane.b32.xlu0 %v1220, 28
        %v1293 = vpop.permute.xlu0 %1292
        %v1295 = vsel %vm346, %v450, %v1269
        %v1296 = vsel %vm393, %v1295, %v1273
        %vm1297 = vcmask 97280
        %v1298 = vsel %vm1297, %v1296, %v1277
        %v1299 = vsel %vm1254, %v1298, %v1281
        %vm1300 = vcmask 162816
        %v1301 = vsel %vm1300, %v1299, %v1285
        %v1302 = vsel %vm1256, %v1301, %v1289
        %vm1303 = vcmask 228352
        %v1304 = vsel %vm1303, %v1302, %v1293
        %v1305 = vpack.c.bf16 %v1304, %v1304
        %v1306 = vld [vmem:[#allocation7] sm:$0xf]
        %v1307 = vld [vmem:[#allocation7 + $0x4] sm:$0xf]
        %v1308 = vld [vmem:[#allocation7 + $0x8] sm:$0xf]
        %v1309 = vld [vmem:[#allocation7 + $0xc] sm:$0xf]
        %v1310 = vld [vmem:[%s3] sm:$0x1]
        %v1312 = vlaneseq
        %v1313 = vshrl.u32 %v1312, 7
        %v1314 = vsub.s32 0, %v1313
        %v1315 = vrot.slane %v1310, %v1314
        %v1321 = vunpack.c.l.b16 %v1306
        %v1322 = vunpack.c.l.b16 %v1307
        %v1323 = vunpack.c.l.b16 %v1308
        %v1324 = vunpack.c.l.b16 %v1309
        %v1325 = vpack.c.b16 %v1322, %v1321
        %v1326 = vpack.c.b16 %v1324, %v1323
        %v1330 = vsel %vm298, %v1305, 0
        %1332 = vmatprep.subr.bf16.mxu0 0
        %1333 = vmatpush1.bf16.msra.mxu0 %v1325
        %1334 = vmatprep.subr.bf16.mxu0 0
        %1335 = vmatpush1.bf16.msra.mxu0 %v1326
        %1336 = vmatprep.subr.bf16.mxu0 0
        %1337 = vmatpush1.bf16.msra.mxu0 0
        %1338 = vmatprep.subr.bf16.mxu0 0
        %1339 = vmatpush1.bf16.msra.mxu0 0
        %1340 = vmatprep.subr.bf16.mxu0 0
        %1341 = vmatpush1.bf16.msra.mxu0 0
        %1342 = vmatprep.subr.bf16.mxu0 0
        %1343 = vmatpush1.bf16.msra.mxu0 0
        %1344 = vmatprep.subr.bf16.mxu0 0
        %1345 = vmatpush1.bf16.msra.mxu0 0
        %1346 = vmatprep.subr.bf16.mxu0 0
        %1347 = vmatpush1.bf16.msra.mxu0 0
        %1348 = vmatprep.subr.bf16.mxu0 0
        %1349 = vmatpush1.bf16.msra.mxu0 0
        %1350 = vmatprep.subr.bf16.mxu0 0
        %1351 = vmatpush1.bf16.msra.mxu0 0
        %1352 = vmatprep.subr.bf16.mxu0 0
        %1353 = vmatpush1.bf16.msra.mxu0 0
        %1354 = vmatprep.subr.bf16.mxu0 0
        %1355 = vmatpush1.bf16.msra.mxu0 0
        %1356 = vmatprep.subr.bf16.mxu0 0
        %1357 = vmatpush1.bf16.msra.mxu0 0
        %1358 = vmatprep.subr.bf16.mxu0 0
        %1359 = vmatpush1.bf16.msra.mxu0 0
        %1360 = vmatprep.subr.bf16.mxu0 0
        %1361 = vmatpush1.bf16.msra.mxu0 0
        %1362 = vmatprep.subr.bf16.mxu0 0
        %1363 = vmatpush1.bf16.msra.mxu0 0
        %1364 = vmatprep.mubr.bf16.mxu0 0
        %1365 = vmatmul.mubr.bf16.gmra.mrb[0].mxu0 %v1330
        %v1366 = vpop.f32.mrb[0].mxu0
        %v1367 = vadd.f32 %v1315, %v1366
        %v1368 = vpop.f32.mrb[0].mxu0
        %v1369 = vpop.f32.mrb[0].mxu0
        %v1370 = vpop.f32.mrb[0].mxu0
        %1371 = vdwg.mxu0
        %1372 = vst.msk [vmem:[%s272] sm:$0xff] %vm298, %v1367
        %s1373 = sand.u32 %s124, 1
        %s1374 = scalar_lea.sflag [#allocation4], %s1373
        %s1375 = sand.u32 %s124, 1
        %s1376 = smul.addr %s1375, 8
        %s1377 = scalar_lea.vmem [#allocation8], %s1376
        %s1378 = sand.u32 %s150, 1
        %s1379 = scalar_lea.sflag [#allocation10], %s1378
        %s1380 = sand.u32 %s150, 1
        %s1381 = smul.addr %s1380, 8
        %s1382 = scalar_lea.vmem [#allocation9], %s1381
        // Predicated region
        $region49: #{tpu_custom_call.1} parent=35 // pred_check
          %p1383 = pneg %p134
        $region50: #{tpu_custom_call.1} parent=35 // pred_check_branch
          %1385 = sbr.rel (%p1383) target = $region52
        $region51: #{tpu_custom_call.1} parent=35 // pred_region
          %s1387 = ssub.s32 128, 128
          %1388 = vsyncadd %s1374, %s1387
          %s1389 = smul.addr %s27, 128
          %s1390 = scalar_lea.hbm %s4, %s1389
          %s1392 = sshll.u32 %s1377, 4
          %s1393 = int_to_ptr.vmem [resolvable:$true] %s1392
          %1395 = dma.vmem_to_hbm [thread:$0]  %s1393, 128, %s1390, %s1374
        $region52: #{tpu_custom_call.1} parent=35 // pred_fallthru
          _
        // Predicated region
        $region53: #{tpu_custom_call.1} parent=35 // pred_check
          %p1396 = pneg %p160
        $region54: #{tpu_custom_call.1} parent=35 // pred_check_branch
          %1398 = sbr.rel (%p1396) target = $region56
        $region55: #{tpu_custom_call.1} parent=35 // pred_region
          %s1400 = ssub.s32 128, 128
          %1401 = vsyncadd %s1379, %s1400
          %s1402 = smul.addr %s27, 128
          %s1403 = scalar_lea.hbm %s5, %s1402
          %s1405 = sshll.u32 %s1382, 4
          %s1406 = int_to_ptr.vmem [resolvable:$true] %s1405
          %1408 = dma.vmem_to_hbm [thread:$0]  %s1406, 128, %s1403, %s1379
        $region56: #{tpu_custom_call.1} parent=35 // pred_fallthru
          _
      $region36: #{tpu_custom_call.1} parent=5 // pred_fallthru
        _
      %p1409 = scmp.le.s32.totalorder 2, %s22
      // Predicated region
      $region57: #{tpu_custom_call.1} parent=5 // pred_check
        %p1410 = pneg %p1409
      $region58: #{tpu_custom_call.1} parent=5 // pred_check_branch
        %1412 = sbr.rel (%p1410) target = $region60
      $region59: #{tpu_custom_call.1} parent=5 // pred_region
        %s1413 = ssub.s32 %s22, 2
        // Predicated region
        $region61: #{tpu_custom_call.1} parent=59 // pred_check
          %p1414 = pneg %p140
        $region62: #{tpu_custom_call.1} parent=59 // pred_check_branch
          %1416 = sbr.rel (%p1414) target = $region64
        $region63: #{tpu_custom_call.1} parent=59 // pred_region
          %s1417 = sand.u32 %s125, 1
          %s1418 = scalar_lea.sflag [#allocation4], %s1417
          %s1419 = sand.u32 %s125, 1
          %s1420 = smul.addr %s1419, 8
          %s1421 = scalar_lea.vmem [#allocation8], %s1420
          %1422 = dma.done %s1418, 128
        $region64: #{tpu_custom_call.1} parent=59 // pred_fallthru
          _
        // Predicated region
        $region65: #{tpu_custom_call.1} parent=59 // pred_check
          %p1423 = pneg %p166
        $region66: #{tpu_custom_call.1} parent=59 // pred_check_branch
          %1425 = sbr.rel (%p1423) target = $region68
        $region67: #{tpu_custom_call.1} parent=59 // pred_region
          %s1426 = sand.u32 %s151, 1
          %s1427 = scalar_lea.sflag [#allocation10], %s1426
          %s1428 = sand.u32 %s151, 1
          %s1429 = smul.addr %s1428, 8
          %s1430 = scalar_lea.vmem [#allocation9], %s1429
          %1431 = dma.done %s1427, 128
        $region68: #{tpu_custom_call.1} parent=59 // pred_fallthru
          _
      $region60: #{tpu_custom_call.1} parent=5 // pred_fallthru
        _
    $region6: #{tpu_custom_call.1} parent=1 // loop_footer
      %s26 = sadd.s32 1, %s22
    $region7: #{tpu_custom_call.1} parent=1 // loop_footer_branch
      %21 = sbr.rel target = $region3
    $region8: #{tpu_custom_call.1} parent=1 // loop_exit
      _
    %1432 = vsyncpa [#allocation3], 1
    %s1433 = scalar_lea.sflag [#allocation3], 1
    %1434 = vsyncpa %s1433, 1
    %1435 = vsyncpa [#allocation6], 1
    %1436 = vsyncpa [#allocation4], 1
    %s1437 = scalar_lea.sflag [#allocation4], 1
    %1438 = vsyncpa %s1437, 1
    %1439 = vsyncpa [#allocation10], 1
    %s1440 = scalar_lea.sflag [#allocation10], 1
    %1441 = vsyncpa %s1440, 1

</llo_original>
